<compile_context>
chip_gen: v7x
topology: tpu7x:2x2x1
jax: 0.10.0
libtpu: 0.0.40
codegen_flags: <defaults>
</compile_context>

<pallas_src>
import math
import functools

import jax
import jax.numpy as jnp
from jax.experimental import pallas as pl
from jax.experimental.pallas import tpu as pltpu

LOG2PI = math.log(2.0 * math.pi)


# -----------------------------------------------------------------------------
# Kernel
# -----------------------------------------------------------------------------
def _vae_kernel(x_ref, eps_ref, w_ref, b_ref, out_ref, *, meta, trunk_dtype):
    """Fused VAE forward for one batch tile.

    meta = (enc_trunk, enc_head, dec_trunk, dec_head), each entry a static
    (d_in, d_out, lane_offset). Head entries are fused (mu | ln_var) blocks.
    """
    enc_trunk, enc_head, dec_trunk, dec_head = meta

    x = x_ref[...]        # f32 [TB, n_in]
    eps = eps_ref[...]    # f32 [TB, n_latent]
    # TODO(synk): eps could be generated in-kernel via pltpu.prng_seed /
    # prng_random_bits to drop this DMA stream; kept as an operand so the
    # kernel is reproducible against the PyTorch/JAX reference.

    def dense(h, layer):
        d_in, d_out, off = layer
        w = w_ref[:d_in, off:off + d_out]          # slab already in matmul dtype
        b = b_ref[:, off:off + d_out]              # f32 bias row
        hm = h if h.dtype == w.dtype else h.astype(w.dtype)   # activation cast only
        y = jnp.dot(hm, w, preferred_element_type=jnp.float32)
        return y + b                               # bias add in f32

    # ---- encoder trunk + fused heads ----
    h = x
    for layer in enc_trunk:
        h = jnp.tanh(dense(h, layer).astype(trunk_dtype))
    heads_e = dense(h, enc_head)                   # f32 [TB, 2*n_latent]
    n_latent = enc_head[1] // 2
    mu_enc = heads_e[:, :n_latent]
    ln_var_enc = heads_e[:, n_latent:]

    # ---- reparameterize (k = 1): z = mu + exp(0.5 * ln_var) * eps ----
    z = mu_enc + jnp.exp(0.5 * ln_var_enc) * eps
    # TODO(synk): k > 1 Monte-Carlo samples would loop the decode below and
    # average RE; the reference forward defaults to k=1.

    # ---- decoder trunk + fused heads ----
    hd = z
    for layer in dec_trunk:
        hd = jnp.tanh(dense(hd, layer).astype(trunk_dtype))
    heads_d = dense(hd, dec_head)                  # f32 [TB, 2*n_in]
    n_in = dec_head[1] // 2
    mu_dec = heads_d[:, :n_in]
    ln_var_dec = heads_d[:, n_in:]

    # ---- Gaussian NLL (reduce='sum') and KL(N(mu, var) || N(0, I)), f32 ----
    diff = x - mu_dec
    nll = 0.5 * (LOG2PI + ln_var_dec) + 0.5 * diff * diff * jnp.exp(-ln_var_dec)
    kl_terms = mu_enc * mu_enc + jnp.exp(ln_var_enc) - ln_var_enc - 1.0

    # Two-stage reduction: batch (sublane) axis first, then one lane reduce.
    re_part = jnp.sum(jnp.sum(nll, axis=0, keepdims=True))
    kl_part = 0.5 * jnp.sum(jnp.sum(kl_terms, axis=0, keepdims=True))

    # Lane-dense partial row: lane 0 = RE partial, lane 1 = KL partial, rest 0.
    lane = jax.lax.broadcasted_iota(jnp.int32, (8, 128), 1)
    out_ref[0] = jnp.where(lane == 0, re_part,
                           jnp.where(lane == 1, kl_part, 0.0))


# -----------------------------------------------------------------------------
# Small host-side helpers
# -----------------------------------------------------------------------------
def _prefer_even_blocks():
    """v7x has 2 TensorCores per chip sharing the 'parallel' grid axis."""
    try:
        return "v7" in jax.devices()[0].device_kind.lower()
    except Exception:
        return False


def _default_trunk_dtype(weight_dtype):
    """bf16 trunk activations only where the VPU/EUP support bf16 (v6e/v7x)."""
    if weight_dtype != jnp.bfloat16:
        return jnp.float32
    try:
        kind = jax.devices()[0].device_kind.lower()
    except Exception:
        return jnp.float32
    for old in ("v2", "v3", "v4", "v5"):
        if old in kind:
            return jnp.float32
    return jnp.bfloat16


def _choose_batch_tile(batch, block_batch, even_blocks):
    """Largest tile <= block_batch that divides batch, keeps the tile a
    multiple of 8 sublanes (unless it is the full batch), and -- when
    even_blocks is set (v7x) -- yields an even block count >= 2."""
    def ok(nb, require_even):
        if batch % nb:
            return False
        if require_even and nb % 2:
            return False
        tb = batch // nb
        return tb == batch or tb % 8 == 0

    start = max(1, -(-batch // block_batch))       # ceil(batch / block_batch)
    for require_even in ((True, False) if even_blocks else (False,)):
        for nb in range(start, batch + 1):
            if ok(nb, require_even):
                return batch // nb
    return batch


# -----------------------------------------------------------------------------
# Wrapper
# -----------------------------------------------------------------------------
def gaussian_network_forward(x, eps, w_slab, b_slab, *, meta,
                             block_batch=512, trunk_dtype=None,
                             even_blocks=None):
    """Fused GaussianNetwork.forward(x, k=1). Returns (RE, KL) scalars."""
    batch, n_in = x.shape
    n_latent = eps.shape[1]

    if even_blocks is None:
        even_blocks = _prefer_even_blocks()
    if trunk_dtype is None:
        trunk_dtype = _default_trunk_dtype(w_slab.dtype)

    tb = _choose_batch_tile(batch, block_batch, even_blocks)
    num_blocks = batch // tb

    enc_trunk, enc_head, dec_trunk, dec_head = meta
    all_blocks = tuple(enc_trunk) + (enc_head,) + tuple(dec_trunk) + (dec_head,)

    # Advisory cost estimate for the XLA scheduler.
    flops = 2 * batch * sum(d_in * d_out for d_in, d_out, _ in all_blocks)
    tanh_elems = batch * sum(d_out for _, d_out, _ in tuple(enc_trunk) + tuple(dec_trunk))
    transcendentals = tanh_elems + batch * (2 * n_latent + n_in)
    bytes_accessed = (x.size * x.dtype.itemsize
                      + eps.size * eps.dtype.itemsize
                      + w_slab.size * w_slab.dtype.itemsize
                      + b_slab.size * b_slab.dtype.itemsize
                      + num_blocks * 8 * 128 * 4)

    # VMEM budget: single-buffered slabs + double-buffered x/eps/out tiles
    # + headroom for live activations, with 2x margin (matters on v7x).
    max_w = max(max(d_out for _, d_out, _ in all_blocks), n_in)
    need = (w_slab.size * w_slab.dtype.itemsize
            + b_slab.size * b_slab.dtype.itemsize
            + 2 * 4 * (tb * n_in + tb * n_latent + 8 * 128)
            + 8 * tb * max_w * 4)
    vmem_limit = int(min(max(2 * need, 16 << 20), 128 << 20))

    kernel = functools.partial(_vae_kernel, meta=meta, trunk_dtype=trunk_dtype)

    partials = pl.pallas_call(
        kernel,
        out_shape=jax.ShapeDtypeStruct((num_blocks, 8, 128), jnp.float32),
        grid=(num_blocks,),
        in_specs=[
            pl.BlockSpec((tb, n_in), lambda i: (i, 0)),        # x batch tile
            pl.BlockSpec((tb, n_latent), lambda i: (i, 0)),    # eps batch tile
            pl.BlockSpec(w_slab.shape, lambda i: (0, 0),       # resident weights
                         pipeline_mode=pl.Buffered(1)),
            pl.BlockSpec(b_slab.shape, lambda i: (0, 0),       # resident biases
                         pipeline_mode=pl.Buffered(1)),
        ],
        out_specs=pl.BlockSpec((1, 8, 128), lambda i: (i, 0, 0)),
        compiler_params=pltpu.CompilerParams(
            dimension_semantics=("parallel",),
            vmem_limit_bytes=vmem_limit),
        cost_estimate=pl.CostEstimate(flops=int(flops),
                                      transcendentals=int(transcendentals),
                                      bytes_accessed=int(bytes_accessed)),
    )(x, eps, w_slab, b_slab)

    re = jnp.sum(partials[:, 0, 0])
    kl = jnp.sum(partials[:, 0, 1])
    return re, kl


# -----------------------------------------------------------------------------
# Parameter construction / packing
# -----------------------------------------------------------------------------
def init_linear(key, n_in, n_out):
    """PyTorch-style nn.Linear init: U(-1/sqrt(fan_in), 1/sqrt(fan_in)).
    Weight stored pre-transposed as [n_in, n_out]; bias as [1, n_out]."""
    kw, kb = jax.random.split(key)
    bound = 1.0 / math.sqrt(n_in)
    w = jax.random.uniform(kw, (n_in, n_out), jnp.float32, -bound, bound)
    b = jax.random.uniform(kb, (1, n_out), jnp.float32, -bound, bound)
    return w, b


def init_gaussian_network_params(key, n_in, n_latent, n_h, layers=3):
    keys = jax.random.split(key, 2 * layers + 4)
    params = []
    # encoder trunk le1
    params.append(init_linear(keys[0], n_in, n_h))
    for i in range(layers - 1):
        params.append(init_linear(keys[1 + i], n_h, n_h))
    # encoder heads
    params.append(init_linear(keys[layers], n_h, n_latent))        # le2_mu
    params.append(init_linear(keys[layers + 1], n_h, n_latent))    # le2_ln_var
    # decoder trunk ld1
    params.append(init_linear(keys[layers + 2], n_latent, n_h))
    for i in range(layers - 1):
        params.append(init_linear(keys[layers + 3 + i], n_h, n_h))
    # decoder heads
    params.append(init_linear(keys[2 * layers + 2], n_h, n_in))    # ld2_mu
    params.append(init_linear(keys[2 * layers + 3], n_h, n_in))    # ld2_ln_var
    return params


def pack_params(params, layers, *, lane_align=128, weight_dtype=jnp.bfloat16):
    """Pack all weights into one [max_in, total] slab in `weight_dtype`
    (128-lane-aligned column blocks, rows zero-padded) and all biases into one
    f32 [1, total] slab. The (mu, ln_var) head pairs are fused into single
    column blocks. Returns (w_slab, b_slab, meta) with static meta."""
    enc_trunk = params[:layers]
    enc_mu, enc_ln_var = params[layers], params[layers + 1]
    dec_trunk = params[layers + 2: 2 * layers + 2]
    dec_mu, dec_ln_var = params[2 * layers + 2], params[2 * layers + 3]

    def fuse(a, b):
        return (jnp.concatenate([a[0], b[0]], axis=1),
                jnp.concatenate([a[1], b[1]], axis=1))

    blocks = (list(enc_trunk) + [fuse(enc_mu, enc_ln_var)]
              + list(dec_trunk) + [fuse(dec_mu, dec_ln_var)])

    dims = [(int(w.shape[0]), int(w.shape[1])) for (w, _) in blocks]
    max_in = max(d_in for d_in, _ in dims)
    offs, off = [], 0
    for _, d_out in dims:
        offs.append(off)
        off += ((d_out + lane_align - 1) // lane_align) * lane_align
    total = off

    w_slab = jnp.zeros((max_in, total), weight_dtype)
    b_slab = jnp.zeros((1, total), jnp.float32)
    for (w, b), (d_in, d_out), o in zip(blocks, dims, offs):
        w_slab = w_slab.at[:d_in, o:o + d_out].set(w.astype(weight_dtype))
        b_slab = b_slab.at[:, o:o + d_out].set(b.reshape(1, d_out).astype(jnp.float32))

    entries = tuple((d_in, d_out, o) for (d_in, d_out), o in zip(dims, offs))
    meta = (entries[:layers],                       # encoder trunk
            entries[layers],                        # fused encoder head
            entries[layers + 1: 2 * layers + 1],    # decoder trunk
            entries[2 * layers + 1])                # fused decoder head
    return w_slab, b_slab, meta


# -----------------------------------------------------------------------------
# Pure-JAX f32 reference (mirrors the PyTorch module, k=1)
# -----------------------------------------------------------------------------
def gaussian_network_reference(params, x, eps, *, layers):
    def dense(h, wb):
        w, b = wb
        return h @ w + b
    idx = 0
    h = x
    for _ in range(layers):
        h = jnp.tanh(dense(h, params[idx])); idx += 1
    mu_enc = dense(h, params[idx]); idx += 1
    ln_var_enc = dense(h, params[idx]); idx += 1
    z = mu_enc + jnp.exp(0.5 * ln_var_enc) * eps
    hd = z
    for _ in range(layers):
        hd = jnp.tanh(dense(hd, params[idx])); idx += 1
    mu_dec = dense(hd, params[idx]); idx += 1
    ln_var_dec = dense(hd, params[idx]); idx += 1
    diff = x - mu_dec
    re = jnp.sum(0.5 * (LOG2PI + ln_var_dec) + 0.5 * diff * diff * jnp.exp(-ln_var_dec))
    kl = 0.5 * jnp.sum(mu_enc ** 2 + jnp.exp(ln_var_enc) - ln_var_enc - 1.0)
    return re, kl


# -----------------------------------------------------------------------------
# Example
# -----------------------------------------------------------------------------
if __name__ == "__main__":
    n_in, n_latent, n_h, layers = 16, 8, 32, 3
    batch, block_batch = 64, 32            # 2 grid blocks at demo scale

    key = jax.random.PRNGKey(0)
    k_x, k_eps, k_params = jax.random.split(key, 3)

    x = jax.random.normal(k_x, (batch, n_in), jnp.float32)
    eps = jax.random.normal(k_eps, (batch, n_latent), jnp.float32)  # k = 1 sample
    params = init_gaussian_network_params(k_params, n_in, n_latent, n_h, layers)

    # ---- f32-slab path: tolerance check against the pure-JAX reference ----
    w32, b32, meta = pack_params(params, layers, weight_dtype=jnp.float32)
    fwd32 = jax.jit(functools.partial(gaussian_network_forward, meta=meta,
                                      block_batch=block_batch,
                                      trunk_dtype=jnp.float32))
    re32, kl32 = fwd32(x, eps, w32, b32)
    re_ref, kl_ref = gaussian_network_reference(params, x, eps, layers=layers)
    jax.block_until_ready((re32, kl32, re_ref, kl_ref))
    for name, got, want in (("RE", re32, re_ref), ("KL", kl32, kl_ref)):
        err = abs(float(got) - float(want))
        tol = 1e-2 * max(1.0, abs(float(want)))
        if err > tol:
            raise AssertionError(f"{name} mismatch: kernel={float(got)} ref={float(want)}")

    # ---- bf16-slab path (production default: bf16 weights, bf16 trunk on v6e/v7x) ----
    wbf, bbf, meta_bf = pack_params(params, layers, weight_dtype=jnp.bfloat16)
    fwd = jax.jit(functools.partial(gaussian_network_forward, meta=meta_bf,
                                    block_batch=block_batch))
    re, kl = fwd(x, eps, wbf, bbf)
    jax.block_until_ready((re, kl))

    print("KERNEL_OK")
</pallas_src>

<mosaic_0001>
module attributes {stable_mosaic.version = 11 : i64} {
  func.func @_vae_kernel(%arg0: i32, %arg1: memref<32x16xf32, #tpu.memory_space<vmem>>, %arg2: memref<32x8xf32, #tpu.memory_space<vmem>>, %arg3: memref<32x1024xf32, #tpu.memory_space<vmem>>, %arg4: memref<1x1024xf32, #tpu.memory_space<vmem>>, %arg5: memref<1x8x128xf32, #tpu.memory_space<vmem>>) attributes {dimension_semantics = [#tpu.dimension_semantics<parallel>], iteration_bounds = array<i64: 2>, scalar_prefetch = 0 : i64, scratch_operands = 0 : i64, tpu.core_type = #tpu.core_type<tc>, window_params = [{transform_indices = @transform_0, window_bounds = array<i64: 32, 16>}, {transform_indices = @transform_1, window_bounds = array<i64: 32, 8>}, {pipeline_mode = #tpu.pipeline_mode<synchronous>, transform_indices = @transform_2, window_bounds = array<i64: 32, 1024>}, {pipeline_mode = #tpu.pipeline_mode<synchronous>, transform_indices = @transform_3, window_bounds = array<i64: 1, 1024>}, {transform_indices = @transform_4, window_bounds = array<i64: 1, 8, 128>}]} {
    %c0 = arith.constant 0 : index
    %c0_0 = arith.constant 0 : index
    %0 = vector.load %arg1[%c0, %c0_0] : memref<32x16xf32, #tpu.memory_space<vmem>>, vector<32x16xf32>
    %c0_1 = arith.constant 0 : index
    %c0_2 = arith.constant 0 : index
    %1 = vector.load %arg2[%c0_1, %c0_2] : memref<32x8xf32, #tpu.memory_space<vmem>>, vector<32x8xf32>
    %c0_3 = arith.constant 0 : index
    %c0_4 = arith.constant 0 : index
    %2 = vector.load %arg3[%c0_3, %c0_4] : memref<32x1024xf32, #tpu.memory_space<vmem>>, vector<16x32xf32>
    %c0_5 = arith.constant 0 : index
    %c0_6 = arith.constant 0 : index
    %3 = vector.load %arg4[%c0_5, %c0_6] : memref<1x1024xf32, #tpu.memory_space<vmem>>, vector<1x32xf32>
    %cst = arith.constant dense<0.000000e+00> : vector<32x32xf32>
    %4 = tpu.matmul %0, %2, %cst {dimension_numbers = #tpu.dot_dimension_numbers<[1], [0], [0], [1], [0, 0, 1, 1], [], []>} : vector<32x16xf32>, vector<16x32xf32>, vector<32x32xf32> -> vector<32x32xf32>
    %5 = vector.broadcast %3 : vector<1x32xf32> to vector<32x32xf32>
    %6 = arith.addf %4, %5 : vector<32x32xf32>
    %7 = math.tanh %6 : vector<32x32xf32>
    %c0_7 = arith.constant 0 : index
    %c128 = arith.constant 128 : index
    %8 = vector.load %arg3[%c0_7, %c128] : memref<32x1024xf32, #tpu.memory_space<vmem>>, vector<32x32xf32>
    %c0_8 = arith.constant 0 : index
    %c128_9 = arith.constant 128 : index
    %9 = vector.load %arg4[%c0_8, %c128_9] : memref<1x1024xf32, #tpu.memory_space<vmem>>, vector<1x32xf32>
    %cst_10 = arith.constant dense<0.000000e+00> : vector<32x32xf32>
    %10 = tpu.matmul %7, %8, %cst_10 {dimension_numbers = #tpu.dot_dimension_numbers<[1], [0], [0], [1], [0, 0, 1, 1], [], []>} : vector<32x32xf32>, vector<32x32xf32>, vector<32x32xf32> -> vector<32x32xf32>
    %11 = vector.broadcast %9 : vector<1x32xf32> to vector<32x32xf32>
    %12 = arith.addf %10, %11 : vector<32x32xf32>
    %13 = math.tanh %12 : vector<32x32xf32>
    %c0_11 = arith.constant 0 : index
    %c256 = arith.constant 256 : index
    %14 = vector.load %arg3[%c0_11, %c256] : memref<32x1024xf32, #tpu.memory_space<vmem>>, vector<32x32xf32>
    %c0_12 = arith.constant 0 : index
    %c256_13 = arith.constant 256 : index
    %15 = vector.load %arg4[%c0_12, %c256_13] : memref<1x1024xf32, #tpu.memory_space<vmem>>, vector<1x32xf32>
    %cst_14 = arith.constant dense<0.000000e+00> : vector<32x32xf32>
    %16 = tpu.matmul %13, %14, %cst_14 {dimension_numbers = #tpu.dot_dimension_numbers<[1], [0], [0], [1], [0, 0, 1, 1], [], []>} : vector<32x32xf32>, vector<32x32xf32>, vector<32x32xf32> -> vector<32x32xf32>
    %17 = vector.broadcast %15 : vector<1x32xf32> to vector<32x32xf32>
    %18 = arith.addf %16, %17 : vector<32x32xf32>
    %19 = math.tanh %18 : vector<32x32xf32>
    %c0_15 = arith.constant 0 : index
    %c384 = arith.constant 384 : index
    %20 = vector.load %arg3[%c0_15, %c384] : memref<32x1024xf32, #tpu.memory_space<vmem>>, vector<32x16xf32>
    %c0_16 = arith.constant 0 : index
    %c384_17 = arith.constant 384 : index
    %21 = vector.load %arg4[%c0_16, %c384_17] : memref<1x1024xf32, #tpu.memory_space<vmem>>, vector<1x16xf32>
    %cst_18 = arith.constant dense<0.000000e+00> : vector<32x16xf32>
    %22 = tpu.matmul %19, %20, %cst_18 {dimension_numbers = #tpu.dot_dimension_numbers<[1], [0], [0], [1], [0, 0, 1, 1], [], []>} : vector<32x32xf32>, vector<32x16xf32>, vector<32x16xf32> -> vector<32x16xf32>
    %23 = vector.broadcast %21 : vector<1x16xf32> to vector<32x16xf32>
    %24 = arith.addf %22, %23 : vector<32x16xf32>
    %25 = vector.extract_strided_slice %24 {offsets = [0, 0], sizes = [32, 8], strides = [1, 1]} : vector<32x16xf32> to vector<32x8xf32>
    %26 = vector.extract_strided_slice %24 {offsets = [0, 8], sizes = [32, 8], strides = [1, 1]} : vector<32x16xf32> to vector<32x8xf32>
    %cst_19 = arith.constant 5.000000e-01 : f32
    %27 = vector.broadcast %cst_19 : f32 to vector<32x8xf32>
    %28 = arith.mulf %27, %26 : vector<32x8xf32>
    %29 = math.exp %28 : vector<32x8xf32>
    %30 = arith.mulf %29, %1 : vector<32x8xf32>
    %31 = arith.addf %25, %30 : vector<32x8xf32>
    %c0_20 = arith.constant 0 : index
    %c512 = arith.constant 512 : index
    %32 = vector.load %arg3[%c0_20, %c512] : memref<32x1024xf32, #tpu.memory_space<vmem>>, vector<8x32xf32>
    %c0_21 = arith.constant 0 : index
    %c512_22 = arith.constant 512 : index
    %33 = vector.load %arg4[%c0_21, %c512_22] : memref<1x1024xf32, #tpu.memory_space<vmem>>, vector<1x32xf32>
    %cst_23 = arith.constant dense<0.000000e+00> : vector<32x32xf32>
    %34 = tpu.matmul %31, %32, %cst_23 {dimension_numbers = #tpu.dot_dimension_numbers<[1], [0], [0], [1], [0, 0, 1, 1], [], []>} : vector<32x8xf32>, vector<8x32xf32>, vector<32x32xf32> -> vector<32x32xf32>
    %35 = vector.broadcast %33 : vector<1x32xf32> to vector<32x32xf32>
    %36 = arith.addf %34, %35 : vector<32x32xf32>
    %37 = math.tanh %36 : vector<32x32xf32>
    %c0_24 = arith.constant 0 : index
    %c640 = arith.constant 640 : index
    %38 = vector.load %arg3[%c0_24, %c640] : memref<32x1024xf32, #tpu.memory_space<vmem>>, vector<32x32xf32>
    %c0_25 = arith.constant 0 : index
    %c640_26 = arith.constant 640 : index
    %39 = vector.load %arg4[%c0_25, %c640_26] : memref<1x1024xf32, #tpu.memory_space<vmem>>, vector<1x32xf32>
    %cst_27 = arith.constant dense<0.000000e+00> : vector<32x32xf32>
    %40 = tpu.matmul %37, %38, %cst_27 {dimension_numbers = #tpu.dot_dimension_numbers<[1], [0], [0], [1], [0, 0, 1, 1], [], []>} : vector<32x32xf32>, vector<32x32xf32>, vector<32x32xf32> -> vector<32x32xf32>
    %41 = vector.broadcast %39 : vector<1x32xf32> to vector<32x32xf32>
    %42 = arith.addf %40, %41 : vector<32x32xf32>
    %43 = math.tanh %42 : vector<32x32xf32>
    %c0_28 = arith.constant 0 : index
    %c768 = arith.constant 768 : index
    %44 = vector.load %arg3[%c0_28, %c768] : memref<32x1024xf32, #tpu.memory_space<vmem>>, vector<32x32xf32>
    %c0_29 = arith.constant 0 : index
    %c768_30 = arith.constant 768 : index
    %45 = vector.load %arg4[%c0_29, %c768_30] : memref<1x1024xf32, #tpu.memory_space<vmem>>, vector<1x32xf32>
    %cst_31 = arith.constant dense<0.000000e+00> : vector<32x32xf32>
    %46 = tpu.matmul %43, %44, %cst_31 {dimension_numbers = #tpu.dot_dimension_numbers<[1], [0], [0], [1], [0, 0, 1, 1], [], []>} : vector<32x32xf32>, vector<32x32xf32>, vector<32x32xf32> -> vector<32x32xf32>
    %47 = vector.broadcast %45 : vector<1x32xf32> to vector<32x32xf32>
    %48 = arith.addf %46, %47 : vector<32x32xf32>
    %49 = math.tanh %48 : vector<32x32xf32>
    %c0_32 = arith.constant 0 : index
    %c896 = arith.constant 896 : index
    %50 = vector.load %arg3[%c0_32, %c896] : memref<32x1024xf32, #tpu.memory_space<vmem>>, vector<32x32xf32>
    %c0_33 = arith.constant 0 : index
    %c896_34 = arith.constant 896 : index
    %51 = vector.load %arg4[%c0_33, %c896_34] : memref<1x1024xf32, #tpu.memory_space<vmem>>, vector<1x32xf32>
    %cst_35 = arith.constant dense<0.000000e+00> : vector<32x32xf32>
    %52 = tpu.matmul %49, %50, %cst_35 {dimension_numbers = #tpu.dot_dimension_numbers<[1], [0], [0], [1], [0, 0, 1, 1], [], []>} : vector<32x32xf32>, vector<32x32xf32>, vector<32x32xf32> -> vector<32x32xf32>
    %53 = vector.broadcast %51 : vector<1x32xf32> to vector<32x32xf32>
    %54 = arith.addf %52, %53 : vector<32x32xf32>
    %55 = vector.extract_strided_slice %54 {offsets = [0, 0], sizes = [32, 16], strides = [1, 1]} : vector<32x32xf32> to vector<32x16xf32>
    %56 = vector.extract_strided_slice %54 {offsets = [0, 16], sizes = [32, 16], strides = [1, 1]} : vector<32x32xf32> to vector<32x16xf32>
    %57 = arith.subf %0, %55 : vector<32x16xf32>
    %cst_36 = arith.constant 1.83787704 : f32
    %58 = vector.broadcast %cst_36 : f32 to vector<32x16xf32>
    %59 = arith.addf %58, %56 : vector<32x16xf32>
    %cst_37 = arith.constant 5.000000e-01 : f32
    %60 = vector.broadcast %cst_37 : f32 to vector<32x16xf32>
    %61 = arith.mulf %60, %59 : vector<32x16xf32>
    %cst_38 = arith.constant 5.000000e-01 : f32
    %62 = vector.broadcast %cst_38 : f32 to vector<32x16xf32>
    %63 = arith.mulf %62, %57 : vector<32x16xf32>
    %64 = arith.mulf %63, %57 : vector<32x16xf32>
    %cst_39 = arith.constant 0.000000e+00 : f32
    %65 = vector.broadcast %cst_39 : f32 to vector<32x16xf32>
    %66 = arith.subf %65, %56 : vector<32x16xf32>
    %67 = math.exp %66 : vector<32x16xf32>
    %68 = arith.mulf %64, %67 : vector<32x16xf32>
    %69 = arith.addf %61, %68 : vector<32x16xf32>
    %70 = arith.mulf %25, %25 : vector<32x8xf32>
    %71 = math.exp %26 : vector<32x8xf32>
    %72 = arith.addf %70, %71 : vector<32x8xf32>
    %73 = arith.subf %72, %26 : vector<32x8xf32>
    %cst_40 = arith.constant 1.000000e+00 : f32
    %74 = vector.broadcast %cst_40 : f32 to vector<32x8xf32>
    %75 = arith.subf %73, %74 : vector<32x8xf32>
    %cst_41 = arith.constant dense<0.000000e+00> : vector<16xf32>
    %76 = vector.multi_reduction <add>, %69, %cst_41 [0] : vector<32x16xf32> to vector<16xf32>
    %77 = vector.shape_cast %76 : vector<16xf32> to vector<1x16xf32>
    %78 = vector.shape_cast %77 : vector<1x16xf32> to vector<1x1x16xf32>
    %cst_42 = arith.constant dense<0.000000e+00> : vector<1xf32>
    %79 = vector.multi_reduction <add>, %78, %cst_42 [1, 2] : vector<1x1x16xf32> to vector<1xf32>
    %80 = vector.shape_cast %79 : vector<1xf32> to vector<1x1x1xf32>
    %81 = vector.extract %80[0, 0, 0] : f32 from vector<1x1x1xf32>
    %cst_43 = arith.constant dense<0.000000e+00> : vector<8xf32>
    %82 = vector.multi_reduction <add>, %75, %cst_43 [0] : vector<32x8xf32> to vector<8xf32>
    %83 = vector.shape_cast %82 : vector<8xf32> to vector<1x8xf32>
    %84 = vector.shape_cast %83 : vector<1x8xf32> to vector<1x1x8xf32>
    %cst_44 = arith.constant dense<0.000000e+00> : vector<1xf32>
    %85 = vector.multi_reduction <add>, %84, %cst_44 [1, 2] : vector<1x1x8xf32> to vector<1xf32>
    %86 = vector.shape_cast %85 : vector<1xf32> to vector<1x1x1xf32>
    %87 = vector.extract %86[0, 0, 0] : f32 from vector<1x1x1xf32>
    %cst_45 = arith.constant 5.000000e-01 : f32
    %88 = arith.mulf %cst_45, %87 : f32
    %89 = tpu.iota {dimensions = array<i32: 1>} : vector<8x128xi32>
    %c0_i32 = arith.constant 0 : i32
    %90 = vector.broadcast %c0_i32 : i32 to vector<8x128xi32>
    %91 = arith.cmpi eq, %89, %90 : vector<8x128xi32>
    %c1_i32 = arith.constant 1 : i32
    %92 = vector.broadcast %c1_i32 : i32 to vector<8x128xi32>
    %93 = arith.cmpi eq, %89, %92 : vector<8x128xi32>
    %cst_46 = arith.constant 0.000000e+00 : f32
    %94 = vector.broadcast %88 : f32 to vector<8x128xf32>
    %95 = vector.broadcast %cst_46 : f32 to vector<8x128xf32>
    %96 = arith.select %93, %94, %95 : vector<8x128xi1>, vector<8x128xf32>
    %97 = vector.broadcast %81 : f32 to vector<8x128xf32>
    %98 = arith.select %91, %97, %96 : vector<8x128xi1>, vector<8x128xf32>
    %c0_47 = arith.constant 0 : index
    %c0_48 = arith.constant 0 : index
    %c0_49 = arith.constant 0 : index
    %99 = vector.load %arg5[%c0_47, %c0_48, %c0_49] : memref<1x8x128xf32, #tpu.memory_space<vmem>>, vector<1x8x128xf32>
    %100 = vector.shape_cast %99 : vector<1x8x128xf32> to vector<8x128xf32>
    %101 = vector.shape_cast %98 : vector<8x128xf32> to vector<1x8x128xf32>
    tpu.vector_store %arg5[%c0_47, %c0_48, %c0_49], %101 {strides = array<i32>} : memref<1x8x128xf32, #tpu.memory_space<vmem>>, vector<1x8x128xf32>,
    return
  }
  func.func @transform_0(%arg0: i32) -> (i32, i32) {
    %c0_i32 = arith.constant 0 : i32
    %c0_i32_0 = arith.constant 0 : i32
    return %arg0, %c0_i32 : i32, i32
  }
  func.func @transform_1(%arg0: i32) -> (i32, i32) {
    %c0_i32 = arith.constant 0 : i32
    %c0_i32_0 = arith.constant 0 : i32
    return %arg0, %c0_i32 : i32, i32
  }
  func.func @transform_2(%arg0: i32) -> (i32, i32) {
    %c0_i32 = arith.constant 0 : i32
    %c0_i32_0 = arith.constant 0 : i32
    %c0_i32_1 = arith.constant 0 : i32
    return %c0_i32, %c0_i32_0 : i32, i32
  }
  func.func @transform_3(%arg0: i32) -> (i32, i32) {
    %c0_i32 = arith.constant 0 : i32
    %c0_i32_0 = arith.constant 0 : i32
    %c0_i32_1 = arith.constant 0 : i32
    return %c0_i32, %c0_i32_0 : i32, i32
  }
  func.func @transform_4(%arg0: i32) -> (i32, i32, i32) {
    %c0_i32 = arith.constant 0 : i32
    %c0_i32_0 = arith.constant 0 : i32
    %c0_i32_1 = arith.constant 0 : i32
    return %arg0, %c0_i32, %c0_i32_0 : i32, i32, i32
  }
}

</mosaic_0001>

<llo_original>
// kernel: gaussian_network_forward.1
$region0: #{gaussian_network_forward.1}
  #allocation0 [shape = 'u32[]', space=smem, size = 0x4, offset = 0x4, fixed_abs, tag = 'smem constant byte address 0x4 - core index']
  #allocation1 [shape = 'u32[144,128]{1,0:T(1,128)}', space=vmem, size = 0x12000, scoped, tag = 'internal scratch']
  %s0 = inlined_call_operand.vmem [shape: f32[64,16], index: 0, kind: input, shape index: {}]
  %s1 = inlined_call_operand.vmem [shape: f32[64,8], index: 1, kind: input, shape index: {}]
  %s2 = inlined_call_operand.hbm [shape: f32[32,1024], index: 2, kind: input, shape index: {}]
  %s3 = inlined_call_operand.vmem [shape: f32[1,1024], index: 3, kind: input, shape index: {}]
  %s4 = inlined_call_operand.vmem [shape: f32[2,8,128], index: 4, kind: output, shape index: {}]
  %s5 = sld [smem:[#allocation0]]
  $region53: #{gaussian_network_forward.1} parent=0
    _
  %s7 = ssub.s32 1, %s5
  %s8 = scalar_select 0, %s7, %s5
  $region1: #{gaussian_network_forward.1} parent=0
    #allocation2 [shape = 'u8[131072]{0}', space=vmem, size = 0x20000, scoped, tag = 'input window, operand 2, single buffered']
    #allocation3 [shape = 's32[2]{0}', space=sflag, size = 0x8, scoped, tag = 'scoped memory for gaussian_network_forward.1']
    %9 = vsyncpa [#allocation3], 0
    loop: start=0, step=1, limit=4
    $region2: #{gaussian_network_forward.1} parent=1 // loop_pre_header
      _
    $region3: #{gaussian_network_forward.1} parent=1 // loop_header
      %s11 = sphi 0, %s15
      %p12 = scmp.ge.s32.totalorder %s11, 4
      %s21 = sphi 0, %s23
      %s24 = sphi 0, %s21
      %s25 = sphi 0, %s24
      %s41 = sphi 0, %s25
      %s47 = sphi 0, %s49
      %s50 = sphi 0, %s47
      %s51 = sphi 0, %s50
      %s67 = sphi 0, %s51
      %s71 = sphi 0, %s71
      %s73 = sphi 0, %s71
      %s74 = sphi 0, %s73
      %s88 = sphi 0, %s74
      %s92 = sphi 0, %s92
      %s94 = sphi 0, %s92
      %s95 = sphi 0, %s94
      %s109 = sphi 0, %s95
      %s115 = sphi 0, %s117
      %s118 = sphi 0, %s115
      %s119 = sphi 0, %s118
      %s135 = sphi 0, %s119
    $region4: #{gaussian_network_forward.1} parent=1 // loop_header_branch
      %14 = sbr.rel (%p12) target = $region8
    $region5: #{gaussian_network_forward.1} parent=1 // loop_body
      %s16 = ssub.s32 %s11, 1
      %s17 = ssub.s32 %s11, 2
      %s18 = sadd.s32 %s11, 1
      %s19 = ssub.s32 %s11, %s18
      %p20 = scmp.eq.s32.totalorder %s19, 0
      %s22 = sadd.s32 %s21, 1
      %s23 = scalar_select %p20, %s21, %s22
      %p26 = pneg %p20
      %p27 = scmp.eq.s32.totalorder %s11, 1
      %p28 = por %p26, %p27
      %p29 = scmp.ne.s32.totalorder %s21, %s24
      %p30 = scmp.eq.s32.totalorder %s11, 0
      %p31 = por %p29, %p30
      %p32 = scmp.ne.s32.totalorder %s21, %s24
      %p33 = scmp.eq.s32.totalorder %s16, 1
      %p34 = por %p32, %p33
      %p35 = scmp.ne.s32.totalorder %s24, %s25
      %p36 = scmp.eq.s32.totalorder %s16, 0
      %p37 = por %p35, %p36
      %p38 = scmp.ne.s32.totalorder %s24, %s25
      %p39 = scmp.eq.s32.totalorder %s17, 1
      %p40 = por %p38, %p39
      %p42 = scmp.ne.s32.totalorder %s25, %s41
      %p43 = scmp.eq.s32.totalorder %s17, 0
      %p44 = por %p42, %p43
      %s45 = ssub.s32 %s11, %s18
      %p46 = scmp.eq.s32.totalorder %s45, 0
      %s48 = sadd.s32 %s47, 1
      %s49 = scalar_select %p46, %s47, %s48
      %p52 = pneg %p46
      %p53 = scmp.eq.s32.totalorder %s11, 1
      %p54 = por %p52, %p53
      %p55 = scmp.ne.s32.totalorder %s47, %s50
      %p56 = scmp.eq.s32.totalorder %s11, 0
      %p57 = por %p55, %p56
      %p58 = scmp.ne.s32.totalorder %s47, %s50
      %p59 = scmp.eq.s32.totalorder %s16, 1
      %p60 = por %p58, %p59
      %p61 = scmp.ne.s32.totalorder %s50, %s51
      %p62 = scmp.eq.s32.totalorder %s16, 0
      %p63 = por %p61, %p62
      %p64 = scmp.ne.s32.totalorder %s50, %s51
      %p65 = scmp.eq.s32.totalorder %s17, 1
      %p66 = por %p64, %p65
      %p68 = scmp.ne.s32.totalorder %s51, %s67
      %p69 = scmp.eq.s32.totalorder %s17, 0
      %p70 = por %p68, %p69
      %s72 = sadd.s32 %s71, 1
      %p75 = scmp.eq.s32.totalorder %s11, 1
      %p76 = scmp.ne.s32.totalorder %s71, %s73
      %p77 = scmp.eq.s32.totalorder %s11, 0
      %p78 = por %p76, %p77
      %p79 = scmp.ne.s32.totalorder %s71, %s73
      %p80 = scmp.eq.s32.totalorder %s16, 1
      %p81 = por %p79, %p80
      %p82 = scmp.ne.s32.totalorder %s73, %s74
      %p83 = scmp.eq.s32.totalorder %s16, 0
      %p84 = por %p82, %p83
      %p85 = scmp.ne.s32.totalorder %s73, %s74
      %p86 = scmp.eq.s32.totalorder %s17, 1
      %p87 = por %p85, %p86
      %p89 = scmp.ne.s32.totalorder %s74, %s88
      %p90 = scmp.eq.s32.totalorder %s17, 0
      %p91 = por %p89, %p90
      %s93 = sadd.s32 %s92, 1
      %p96 = scmp.eq.s32.totalorder %s11, 1
      %p97 = scmp.ne.s32.totalorder %s92, %s94
      %p98 = scmp.eq.s32.totalorder %s11, 0
      %p99 = por %p97, %p98
      %p100 = scmp.ne.s32.totalorder %s92, %s94
      %p101 = scmp.eq.s32.totalorder %s16, 1
      %p102 = por %p100, %p101
      %p103 = scmp.ne.s32.totalorder %s94, %s95
      %p104 = scmp.eq.s32.totalorder %s16, 0
      %p105 = por %p103, %p104
      %p106 = scmp.ne.s32.totalorder %s94, %s95
      %p107 = scmp.eq.s32.totalorder %s17, 1
      %p108 = por %p106, %p107
      %p110 = scmp.ne.s32.totalorder %s95, %s109
      %p111 = scmp.eq.s32.totalorder %s17, 0
      %p112 = por %p110, %p111
      %s113 = ssub.s32 %s11, %s18
      %p114 = scmp.eq.s32.totalorder %s113, 0
      %s116 = sadd.s32 %s115, 1
      %s117 = scalar_select %p114, %s115, %s116
      %p120 = pneg %p114
      %p121 = scmp.eq.s32.totalorder %s11, 1
      %p122 = por %p120, %p121
      %p123 = scmp.ne.s32.totalorder %s115, %s118
      %p124 = scmp.eq.s32.totalorder %s11, 0
      %p125 = por %p123, %p124
      %p126 = scmp.ne.s32.totalorder %s115, %s118
      %p127 = scmp.eq.s32.totalorder %s16, 1
      %p128 = por %p126, %p127
      %p129 = scmp.ne.s32.totalorder %s118, %s119
      %p130 = scmp.eq.s32.totalorder %s16, 0
      %p131 = por %p129, %p130
      %p132 = scmp.ne.s32.totalorder %s118, %s119
      %p133 = scmp.eq.s32.totalorder %s17, 1
      %p134 = por %p132, %p133
      %p136 = scmp.ne.s32.totalorder %s119, %s135
      %p137 = scmp.eq.s32.totalorder %s17, 0
      %p138 = por %p136, %p137
      %p139 = scmp.le.s32.totalorder 1, %s11
      %p140 = scmp.lt.s32.totalorder %s11, 3
      %p141 = pnand %p139, %p140
      %p142 = pneg %p141
      // Predicated region
      $region9: #{gaussian_network_forward.1} parent=5 // pred_check
        _
      $region10: #{gaussian_network_forward.1} parent=5 // pred_check_branch
        %144 = sbr.rel (%p141) target = $region12
      $region11: #{gaussian_network_forward.1} parent=5 // pred_region
        %s145 = ssub.s32 %s11, 1
        // Predicated region
        $region13: #{gaussian_network_forward.1} parent=11 // pred_check
          %p146 = pneg %p84
        $region14: #{gaussian_network_forward.1} parent=11 // pred_check_branch
          %148 = sbr.rel (%p146) target = $region16
        $region15: #{gaussian_network_forward.1} parent=11 // pred_region
          %s150 = ssub.s32 4096, 4096
          %151 = vsyncadd [#allocation3], %s150
          %s152 = sshll.u32 [#allocation2], 4
          %s153 = int_to_ptr.vmem [resolvable:$true] %s152
          %158 = dma.hbm_to_vmem [thread:$0]  %s2, 4096, %s153, [#allocation3], 1024, 1024, 64
        $region16: #{gaussian_network_forward.1} parent=11 // pred_fallthru
          _
        // Predicated region
        $region17: #{gaussian_network_forward.1} parent=11 // pred_check
          %p159 = pneg %p105
        $region18: #{gaussian_network_forward.1} parent=11 // pred_check_branch
          %161 = sbr.rel (%p159) target = $region20
        $region19: #{gaussian_network_forward.1} parent=11 // pred_region
          _
        $region20: #{gaussian_network_forward.1} parent=11 // pred_fallthru
          _
      $region12: #{gaussian_network_forward.1} parent=5 // pred_fallthru
        _
      %p162 = scmp.lt.s32.totalorder %s11, 2
      // Predicated region
      $region21: #{gaussian_network_forward.1} parent=5 // pred_check
        %p163 = pneg %p162
      $region22: #{gaussian_network_forward.1} parent=5 // pred_check_branch
        %165 = sbr.rel (%p163) target = $region24
      $region23: #{gaussian_network_forward.1} parent=5 // pred_region
        // Predicated region
        $region25: #{gaussian_network_forward.1} parent=23 // pred_check
          %p166 = pneg %p31
        $region26: #{gaussian_network_forward.1} parent=23 // pred_check_branch
          %168 = sbr.rel (%p166) target = $region28
        $region27: #{gaussian_network_forward.1} parent=23 // pred_region
          %s169 = smul.u32 4, %s11
          %p170 = scmp.lt.s32.totalorder %s169, 7
          %s171 = scalar_select %p170, %s169, 7
          %s172 = smul.addr %s171, 8
          %s173 = scalar_lea.vmem %s0, %s172
          %s174 = smul.u32 4, %s11
        $region28: #{gaussian_network_forward.1} parent=23 // pred_fallthru
          _
        // Predicated region
        $region29: #{gaussian_network_forward.1} parent=23 // pred_check
          %p175 = pneg %p57
        $region30: #{gaussian_network_forward.1} parent=23 // pred_check_branch
          %177 = sbr.rel (%p175) target = $region32
        $region31: #{gaussian_network_forward.1} parent=23 // pred_region
          %s178 = smul.u32 4, %s11
          %p179 = scmp.lt.s32.totalorder %s178, 7
          %s180 = scalar_select %p179, %s178, 7
          %s181 = smul.addr %s180, 8
          %s182 = scalar_lea.vmem %s1, %s181
          %s183 = smul.u32 4, %s11
        $region32: #{gaussian_network_forward.1} parent=23 // pred_fallthru
          _
      $region24: #{gaussian_network_forward.1} parent=5 // pred_fallthru
        _
      %p184 = scmp.le.s32.totalorder 1, %s11
      %p185 = scmp.lt.s32.totalorder %s11, 3
      %p186 = pnand %p184, %p185
      %p187 = pneg %p186
      // Predicated region
      $region33: #{gaussian_network_forward.1} parent=5 // pred_check
        _
      $region34: #{gaussian_network_forward.1} parent=5 // pred_check_branch
        %189 = sbr.rel (%p186) target = $region36
      $region35: #{gaussian_network_forward.1} parent=5 // pred_region
        %s190 = ssub.s32 %s11, 1
        // Predicated region
        $region37: #{gaussian_network_forward.1} parent=35 // pred_check
          %p191 = pneg %p84
        $region38: #{gaussian_network_forward.1} parent=35 // pred_check_branch
          %193 = sbr.rel (%p191) target = $region40
        $region39: #{gaussian_network_forward.1} parent=35 // pred_region
          %194 = dma.done [#allocation3], 4096
        $region40: #{gaussian_network_forward.1} parent=35 // pred_fallthru
          _
        %s195 = smul.u32 4, %s16
        %p196 = scmp.lt.s32.totalorder %s195, 7
        %s197 = scalar_select %p196, %s195, 7
        %s198 = smul.addr %s197, 8
        %s199 = scalar_lea.vmem %s0, %s198
        %p200 = pneg %p37
        %p201 = pneg %p34
        %s202 = smul.u32 4, %s16
        %p203 = scmp.lt.s32.totalorder %s202, 7
        %s204 = scalar_select %p203, %s202, 7
        %s205 = smul.addr %s204, 8
        %s206 = scalar_lea.vmem %s1, %s205
        %p207 = pneg %p63
        %p208 = pneg %p60
        %p209 = pneg %p84
        %p210 = pneg %p81
        %p211 = pneg %p105
        %p212 = pneg %p102
        %p213 = pneg %p131
        %p214 = pneg %p128
        %p215 = scmp.lt.s32.totalorder %s16, 1
        %s216 = scalar_select %p215, %s16, 1
        %s217 = smul.addr %s216, 8
        %s218 = scalar_lea.vmem %s4, %s217
        %s219 = smul.u32 4, %s16
        %p220 = scmp.lt.s32.totalorder %s219, 7
        %s221 = scalar_select %p220, %s219, 7
        %s222 = smul.addr %s221, 8
        %s223 = scalar_lea.vmem %s0, %s222
        %s224 = smul.u32 4, %s16
        %s225 = smul.u32 4, %s16
        %p226 = scmp.lt.s32.totalorder %s225, 7
        %s227 = scalar_select %p226, %s225, 7
        %s228 = smul.addr %s227, 8
        %s229 = scalar_lea.vmem %s1, %s228
        %s230 = smul.u32 4, %s16
        %p231 = scmp.lt.s32.totalorder %s16, 1
        %s232 = scalar_select %p231, %s16, 1
        %s233 = smul.addr %s232, 8
        %s234 = scalar_lea.vmem %s4, %s233
        %v235 = vld [vmem:[%s223] sm:$0xff]
        %v236 = vld [vmem:[%s223 + $0x8] sm:$0xff]
        %v237 = vld [vmem:[%s223 + $0x10] sm:$0xff]
        %v238 = vld [vmem:[%s223 + $0x18] sm:$0xff]
        %v239 = vld [vmem:[%s229] sm:$0xff]
        %v240 = vld [vmem:[%s229 + $0x8] sm:$0xff]
        %v241 = vld [vmem:[%s229 + $0x10] sm:$0xff]
        %v242 = vld [vmem:[%s229 + $0x18] sm:$0xff]
        %v243 = vld [vmem:[#allocation2] sm:$0xff]
        %v244 = vld [vmem:[#allocation2 + $0x40] sm:$0xff]
        %v245 = vld [vmem:[%s3] sm:$0x1]
        %v247 = vlaneseq
        %v248 = vshrl.u32 %v247, 7
        %v249 = vsub.s32 0, %v248
        %v250 = vrot.slane %v245, %v249
        %vm252 = vcmask 130048
        %v254 = vsel %vm252, %v235, 0
        %v257 = vsel %vm252, %v236, 0
        %v260 = vsel %vm252, %v237, 0
        %v263 = vsel %vm252, %v238, 0
        %265 = vmatprep.subr.mxu0 0.0
        %266 = vmatpush1.msra.mxu0 %v243
        %267 = vmatprep.subr.mxu0 0.0
        %268 = vmatpush1.msra.mxu0 %v244
        %269 = vmatprep.subr.mxu0 0.0
        %270 = vmatpush1.msra.mxu0 0.0
        %271 = vmatprep.subr.mxu0 0.0
        %272 = vmatpush1.msra.mxu0 0.0
        %273 = vmatprep.subr.mxu0 0.0
        %274 = vmatpush1.msra.mxu0 0.0
        %275 = vmatprep.subr.mxu0 0.0
        %276 = vmatpush1.msra.mxu0 0.0
        %277 = vmatprep.subr.mxu0 0.0
        %278 = vmatpush1.msra.mxu0 0.0
        %279 = vmatprep.subr.mxu0 0.0
        %280 = vmatpush1.msra.mxu0 0.0
        %281 = vmatprep.subr.mxu0 0.0
        %282 = vmatpush1.msra.mxu0 0.0
        %283 = vmatprep.subr.mxu0 0.0
        %284 = vmatpush1.msra.mxu0 0.0
        %285 = vmatprep.subr.mxu0 0.0
        %286 = vmatpush1.msra.mxu0 0.0
        %287 = vmatprep.subr.mxu0 0.0
        %288 = vmatpush1.msra.mxu0 0.0
        %289 = vmatprep.subr.mxu0 0.0
        %290 = vmatpush1.msra.mxu0 0.0
        %291 = vmatprep.subr.mxu0 0.0
        %292 = vmatpush1.msra.mxu0 0.0
        %293 = vmatprep.subr.mxu0 0.0
        %294 = vmatpush1.msra.mxu0 0.0
        %295 = vmatprep.subr.mxu0 0.0
        %296 = vmatpush1.msra.mxu0 0.0
        %297 = vmatprep.subr.mxu0 0.0
        %298 = vmatpush1.msra.mxu0 0.0
        %299 = vmatprep.subr.mxu0 0.0
        %300 = vmatpush1.msra.mxu0 0.0
        %301 = vmatprep.subr.mxu0 0.0
        %302 = vmatpush1.msra.mxu0 0.0
        %303 = vmatprep.subr.mxu0 0.0
        %304 = vmatpush1.msra.mxu0 0.0
        %305 = vmatprep.subr.mxu0 0.0
        %306 = vmatpush1.msra.mxu0 0.0
        %307 = vmatprep.subr.mxu0 0.0
        %308 = vmatpush1.msra.mxu0 0.0
        %309 = vmatprep.subr.mxu0 0.0
        %310 = vmatpush1.msra.mxu0 0.0
        %311 = vmatprep.subr.mxu0 0.0
        %312 = vmatpush1.msra.mxu0 0.0
        %313 = vmatprep.subr.mxu0 0.0
        %314 = vmatpush1.msra.mxu0 0.0
        %315 = vmatprep.subr.mxu0 0.0
        %316 = vmatpush1.msra.mxu0 0.0
        %317 = vmatprep.subr.mxu0 0.0
        %318 = vmatpush1.msra.mxu0 0.0
        %319 = vmatprep.subr.mxu0 0.0
        %320 = vmatpush1.msra.mxu0 0.0
        %321 = vmatprep.subr.mxu0 0.0
        %322 = vmatpush1.msra.mxu0 0.0
        %323 = vmatprep.subr.mxu0 0.0
        %324 = vmatpush1.msra.mxu0 0.0
        %325 = vmatprep.subr.mxu0 0.0
        %326 = vmatpush1.msra.mxu0 0.0
        %327 = vmatprep.subr.mxu0 0.0
        %328 = vmatpush1.msra.mxu0 0.0
        %329 = vmatprep.mubr.f32.mxu0 0.0
        %330 = vmatmul.mubr.f32.gmra.mrb[0].mxu0 %v254
        %v331 = vpop.f32.mrb[0].mxu0
        %v332 = vadd.f32 %v250, %v331
        %v333 = vpop.f32.mrb[0].mxu0
        %334 = vmatprep.mubr.f32.mxu0 0.0
        %335 = vmatmul.mubr.f32.gmra.mrb[0].mxu0 %v257
        %v336 = vpop.f32.mrb[0].mxu0
        %v337 = vadd.f32 %v250, %v336
        %v338 = vpop.f32.mrb[0].mxu0
        %339 = vmatprep.mubr.f32.mxu0 0.0
        %340 = vmatmul.mubr.f32.gmra.mrb[0].mxu0 %v260
        %v341 = vpop.f32.mrb[0].mxu0
        %v342 = vadd.f32 %v250, %v341
        %v343 = vpop.f32.mrb[0].mxu0
        %344 = vmatprep.mubr.f32.mxu0 0.0
        %345 = vmatmul.mubr.f32.gmra.mrb[0].mxu0 %v263
        %v346 = vpop.f32.mrb[0].mxu0
        %v347 = vadd.f32 %v250, %v346
        %v348 = vpop.f32.mrb[0].mxu0
        %349 = vdwg.mxu0
        %v350 = vtanh.pop %v332
        %v351 = vtanh.pop %v337
        %v352 = vtanh.pop %v342
        %v353 = vtanh.pop %v347
        %v354 = vld [vmem:[#allocation2 + $0x8] sm:$0xff]
        %v355 = vld [vmem:[#allocation2 + $0x48] sm:$0xff]
        %v356 = vld [vmem:[#allocation2 + $0x88] sm:$0xff]
        %v357 = vld [vmem:[#allocation2 + $0xc8] sm:$0xff]
        %v358 = vld [vmem:[%s3 + $0x1] sm:$0x1]
        %v360 = vlaneseq
        %v361 = vshrl.u32 %v360, 7
        %v362 = vsub.s32 0, %v361
        %v363 = vrot.slane %v358, %v362
        %vm365 = vcmask 261120
        %v367 = vsel %vm365, %v350, 0
        %v370 = vsel %vm365, %v351, 0
        %v373 = vsel %vm365, %v352, 0
        %v376 = vsel %vm365, %v353, 0
        %378 = vmatprep.subr.mxu0 0.0
        %379 = vmatpush1.msra.mxu0 %v354
        %380 = vmatprep.subr.mxu0 0.0
        %381 = vmatpush1.msra.mxu0 %v355
        %382 = vmatprep.subr.mxu0 0.0
        %383 = vmatpush1.msra.mxu0 %v356
        %384 = vmatprep.subr.mxu0 0.0
        %385 = vmatpush1.msra.mxu0 %v357
        %386 = vmatprep.subr.mxu0 0.0
        %387 = vmatpush1.msra.mxu0 0.0
        %388 = vmatprep.subr.mxu0 0.0
        %389 = vmatpush1.msra.mxu0 0.0
        %390 = vmatprep.subr.mxu0 0.0
        %391 = vmatpush1.msra.mxu0 0.0
        %392 = vmatprep.subr.mxu0 0.0
        %393 = vmatpush1.msra.mxu0 0.0
        %394 = vmatprep.subr.mxu0 0.0
        %395 = vmatpush1.msra.mxu0 0.0
        %396 = vmatprep.subr.mxu0 0.0
        %397 = vmatpush1.msra.mxu0 0.0
        %398 = vmatprep.subr.mxu0 0.0
        %399 = vmatpush1.msra.mxu0 0.0
        %400 = vmatprep.subr.mxu0 0.0
        %401 = vmatpush1.msra.mxu0 0.0
        %402 = vmatprep.subr.mxu0 0.0
        %403 = vmatpush1.msra.mxu0 0.0
        %404 = vmatprep.subr.mxu0 0.0
        %405 = vmatpush1.msra.mxu0 0.0
        %406 = vmatprep.subr.mxu0 0.0
        %407 = vmatpush1.msra.mxu0 0.0
        %408 = vmatprep.subr.mxu0 0.0
        %409 = vmatpush1.msra.mxu0 0.0
        %410 = vmatprep.subr.mxu0 0.0
        %411 = vmatpush1.msra.mxu0 0.0
        %412 = vmatprep.subr.mxu0 0.0
        %413 = vmatpush1.msra.mxu0 0.0
        %414 = vmatprep.subr.mxu0 0.0
        %415 = vmatpush1.msra.mxu0 0.0
        %416 = vmatprep.subr.mxu0 0.0
        %417 = vmatpush1.msra.mxu0 0.0
        %418 = vmatprep.subr.mxu0 0.0
        %419 = vmatpush1.msra.mxu0 0.0
        %420 = vmatprep.subr.mxu0 0.0
        %421 = vmatpush1.msra.mxu0 0.0
        %422 = vmatprep.subr.mxu0 0.0
        %423 = vmatpush1.msra.mxu0 0.0
        %424 = vmatprep.subr.mxu0 0.0
        %425 = vmatpush1.msra.mxu0 0.0
        %426 = vmatprep.subr.mxu0 0.0
        %427 = vmatpush1.msra.mxu0 0.0
        %428 = vmatprep.subr.mxu0 0.0
        %429 = vmatpush1.msra.mxu0 0.0
        %430 = vmatprep.subr.mxu0 0.0
        %431 = vmatpush1.msra.mxu0 0.0
        %432 = vmatprep.subr.mxu0 0.0
        %433 = vmatpush1.msra.mxu0 0.0
        %434 = vmatprep.subr.mxu0 0.0
        %435 = vmatpush1.msra.mxu0 0.0
        %436 = vmatprep.subr.mxu0 0.0
        %437 = vmatpush1.msra.mxu0 0.0
        %438 = vmatprep.subr.mxu0 0.0
        %439 = vmatpush1.msra.mxu0 0.0
        %440 = vmatprep.subr.mxu0 0.0
        %441 = vmatpush1.msra.mxu0 0.0
        %442 = vmatprep.mubr.f32.mxu0 0.0
        %443 = vmatmul.mubr.f32.gmra.mrb[0].mxu0 %v367
        %v444 = vpop.f32.mrb[0].mxu0
        %v445 = vadd.f32 %v363, %v444
        %v446 = vpop.f32.mrb[0].mxu0
        %447 = vmatprep.mubr.f32.mxu0 0.0
        %448 = vmatmul.mubr.f32.gmra.mrb[0].mxu0 %v370
        %v449 = vpop.f32.mrb[0].mxu0
        %v450 = vadd.f32 %v363, %v449
        %v451 = vpop.f32.mrb[0].mxu0
        %452 = vmatprep.mubr.f32.mxu0 0.0
        %453 = vmatmul.mubr.f32.gmra.mrb[0].mxu0 %v373
        %v454 = vpop.f32.mrb[0].mxu0
        %v455 = vadd.f32 %v363, %v454
        %v456 = vpop.f32.mrb[0].mxu0
        %457 = vmatprep.mubr.f32.mxu0 0.0
        %458 = vmatmul.mubr.f32.gmra.mrb[0].mxu0 %v376
        %v459 = vpop.f32.mrb[0].mxu0
        %v460 = vadd.f32 %v363, %v459
        %v461 = vpop.f32.mrb[0].mxu0
        %462 = vdwg.mxu0
        %v463 = vtanh.pop %v445
        %v464 = vtanh.pop %v450
        %v465 = vtanh.pop %v455
        %v466 = vtanh.pop %v460
        %v467 = vld [vmem:[#allocation2 + $0x10] sm:$0xff]
        %v468 = vld [vmem:[#allocation2 + $0x50] sm:$0xff]
        %v469 = vld [vmem:[#allocation2 + $0x90] sm:$0xff]
        %v470 = vld [vmem:[#allocation2 + $0xd0] sm:$0xff]
        %v471 = vld [vmem:[%s3 + $0x2] sm:$0x1]
        %v473 = vlaneseq
        %v474 = vshrl.u32 %v473, 7
        %v475 = vsub.s32 0, %v474
        %v476 = vrot.slane %v471, %v475
        %v479 = vsel %vm365, %v463, 0
        %v482 = vsel %vm365, %v464, 0
        %v485 = vsel %vm365, %v465, 0
        %v488 = vsel %vm365, %v466, 0
        %490 = vmatprep.subr.mxu0 0.0
        %491 = vmatpush1.msra.mxu0 %v467
        %492 = vmatprep.subr.mxu0 0.0
        %493 = vmatpush1.msra.mxu0 %v468
        %494 = vmatprep.subr.mxu0 0.0
        %495 = vmatpush1.msra.mxu0 %v469
        %496 = vmatprep.subr.mxu0 0.0
        %497 = vmatpush1.msra.mxu0 %v470
        %498 = vmatprep.subr.mxu0 0.0
        %499 = vmatpush1.msra.mxu0 0.0
        %500 = vmatprep.subr.mxu0 0.0
        %501 = vmatpush1.msra.mxu0 0.0
        %502 = vmatprep.subr.mxu0 0.0
        %503 = vmatpush1.msra.mxu0 0.0
        %504 = vmatprep.subr.mxu0 0.0
        %505 = vmatpush1.msra.mxu0 0.0
        %506 = vmatprep.subr.mxu0 0.0
        %507 = vmatpush1.msra.mxu0 0.0
        %508 = vmatprep.subr.mxu0 0.0
        %509 = vmatpush1.msra.mxu0 0.0
        %510 = vmatprep.subr.mxu0 0.0
        %511 = vmatpush1.msra.mxu0 0.0
        %512 = vmatprep.subr.mxu0 0.0
        %513 = vmatpush1.msra.mxu0 0.0
        %514 = vmatprep.subr.mxu0 0.0
        %515 = vmatpush1.msra.mxu0 0.0
        %516 = vmatprep.subr.mxu0 0.0
        %517 = vmatpush1.msra.mxu0 0.0
        %518 = vmatprep.subr.mxu0 0.0
        %519 = vmatpush1.msra.mxu0 0.0
        %520 = vmatprep.subr.mxu0 0.0
        %521 = vmatpush1.msra.mxu0 0.0
        %522 = vmatprep.subr.mxu0 0.0
        %523 = vmatpush1.msra.mxu0 0.0
        %524 = vmatprep.subr.mxu0 0.0
        %525 = vmatpush1.msra.mxu0 0.0
        %526 = vmatprep.subr.mxu0 0.0
        %527 = vmatpush1.msra.mxu0 0.0
        %528 = vmatprep.subr.mxu0 0.0
        %529 = vmatpush1.msra.mxu0 0.0
        %530 = vmatprep.subr.mxu0 0.0
        %531 = vmatpush1.msra.mxu0 0.0
        %532 = vmatprep.subr.mxu0 0.0
        %533 = vmatpush1.msra.mxu0 0.0
        %534 = vmatprep.subr.mxu0 0.0
        %535 = vmatpush1.msra.mxu0 0.0
        %536 = vmatprep.subr.mxu0 0.0
        %537 = vmatpush1.msra.mxu0 0.0
        %538 = vmatprep.subr.mxu0 0.0
        %539 = vmatpush1.msra.mxu0 0.0
        %540 = vmatprep.subr.mxu0 0.0
        %541 = vmatpush1.msra.mxu0 0.0
        %542 = vmatprep.subr.mxu0 0.0
        %543 = vmatpush1.msra.mxu0 0.0
        %544 = vmatprep.subr.mxu0 0.0
        %545 = vmatpush1.msra.mxu0 0.0
        %546 = vmatprep.subr.mxu0 0.0
        %547 = vmatpush1.msra.mxu0 0.0
        %548 = vmatprep.subr.mxu0 0.0
        %549 = vmatpush1.msra.mxu0 0.0
        %550 = vmatprep.subr.mxu0 0.0
        %551 = vmatpush1.msra.mxu0 0.0
        %552 = vmatprep.subr.mxu0 0.0
        %553 = vmatpush1.msra.mxu0 0.0
        %554 = vmatprep.mubr.f32.mxu0 0.0
        %555 = vmatmul.mubr.f32.gmra.mrb[0].mxu0 %v479
        %v556 = vpop.f32.mrb[0].mxu0
        %v557 = vadd.f32 %v476, %v556
        %v558 = vpop.f32.mrb[0].mxu0
        %559 = vmatprep.mubr.f32.mxu0 0.0
        %560 = vmatmul.mubr.f32.gmra.mrb[0].mxu0 %v482
        %v561 = vpop.f32.mrb[0].mxu0
        %v562 = vadd.f32 %v476, %v561
        %v563 = vpop.f32.mrb[0].mxu0
        %564 = vmatprep.mubr.f32.mxu0 0.0
        %565 = vmatmul.mubr.f32.gmra.mrb[0].mxu0 %v485
        %v566 = vpop.f32.mrb[0].mxu0
        %v567 = vadd.f32 %v476, %v566
        %v568 = vpop.f32.mrb[0].mxu0
        %569 = vmatprep.mubr.f32.mxu0 0.0
        %570 = vmatmul.mubr.f32.gmra.mrb[0].mxu0 %v488
        %v571 = vpop.f32.mrb[0].mxu0
        %v572 = vadd.f32 %v476, %v571
        %v573 = vpop.f32.mrb[0].mxu0
        %574 = vdwg.mxu0
        %v575 = vtanh.pop %v557
        %v576 = vtanh.pop %v562
        %v577 = vtanh.pop %v567
        %v578 = vtanh.pop %v572
        %v579 = vld [vmem:[#allocation2 + $0x18] sm:$0xff]
        %v580 = vld [vmem:[#allocation2 + $0x58] sm:$0xff]
        %v581 = vld [vmem:[#allocation2 + $0x98] sm:$0xff]
        %v582 = vld [vmem:[#allocation2 + $0xd8] sm:$0xff]
        %v583 = vld [vmem:[%s3 + $0x3] sm:$0x1]
        %v585 = vlaneseq
        %v586 = vshrl.u32 %v585, 7
        %v587 = vsub.s32 0, %v586
        %v588 = vrot.slane %v583, %v587
        %v591 = vsel %vm365, %v575, 0
        %v594 = vsel %vm365, %v576, 0
        %v597 = vsel %vm365, %v577, 0
        %v600 = vsel %vm365, %v578, 0
        %602 = vmatprep.subr.mxu0 0.0
        %603 = vmatpush1.msra.mxu0 %v579
        %604 = vmatprep.subr.mxu0 0.0
        %605 = vmatpush1.msra.mxu0 %v580
        %606 = vmatprep.subr.mxu0 0.0
        %607 = vmatpush1.msra.mxu0 %v581
        %608 = vmatprep.subr.mxu0 0.0
        %609 = vmatpush1.msra.mxu0 %v582
        %610 = vmatprep.subr.mxu0 0.0
        %611 = vmatpush1.msra.mxu0 0.0
        %612 = vmatprep.subr.mxu0 0.0
        %613 = vmatpush1.msra.mxu0 0.0
        %614 = vmatprep.subr.mxu0 0.0
        %615 = vmatpush1.msra.mxu0 0.0
        %616 = vmatprep.subr.mxu0 0.0
        %617 = vmatpush1.msra.mxu0 0.0
        %618 = vmatprep.subr.mxu0 0.0
        %619 = vmatpush1.msra.mxu0 0.0
        %620 = vmatprep.subr.mxu0 0.0
        %621 = vmatpush1.msra.mxu0 0.0
        %622 = vmatprep.subr.mxu0 0.0
        %623 = vmatpush1.msra.mxu0 0.0
        %624 = vmatprep.subr.mxu0 0.0
        %625 = vmatpush1.msra.mxu0 0.0
        %626 = vmatprep.subr.mxu0 0.0
        %627 = vmatpush1.msra.mxu0 0.0
        %628 = vmatprep.subr.mxu0 0.0
        %629 = vmatpush1.msra.mxu0 0.0
        %630 = vmatprep.subr.mxu0 0.0
        %631 = vmatpush1.msra.mxu0 0.0
        %632 = vmatprep.subr.mxu0 0.0
        %633 = vmatpush1.msra.mxu0 0.0
        %634 = vmatprep.subr.mxu0 0.0
        %635 = vmatpush1.msra.mxu0 0.0
        %636 = vmatprep.subr.mxu0 0.0
        %637 = vmatpush1.msra.mxu0 0.0
        %638 = vmatprep.subr.mxu0 0.0
        %639 = vmatpush1.msra.mxu0 0.0
        %640 = vmatprep.subr.mxu0 0.0
        %641 = vmatpush1.msra.mxu0 0.0
        %642 = vmatprep.subr.mxu0 0.0
        %643 = vmatpush1.msra.mxu0 0.0
        %644 = vmatprep.subr.mxu0 0.0
        %645 = vmatpush1.msra.mxu0 0.0
        %646 = vmatprep.subr.mxu0 0.0
        %647 = vmatpush1.msra.mxu0 0.0
        %648 = vmatprep.subr.mxu0 0.0
        %649 = vmatpush1.msra.mxu0 0.0
        %650 = vmatprep.subr.mxu0 0.0
        %651 = vmatpush1.msra.mxu0 0.0
        %652 = vmatprep.subr.mxu0 0.0
        %653 = vmatpush1.msra.mxu0 0.0
        %654 = vmatprep.subr.mxu0 0.0
        %655 = vmatpush1.msra.mxu0 0.0
        %656 = vmatprep.subr.mxu0 0.0
        %657 = vmatpush1.msra.mxu0 0.0
        %658 = vmatprep.subr.mxu0 0.0
        %659 = vmatpush1.msra.mxu0 0.0
        %660 = vmatprep.subr.mxu0 0.0
        %661 = vmatpush1.msra.mxu0 0.0
        %662 = vmatprep.subr.mxu0 0.0
        %663 = vmatpush1.msra.mxu0 0.0
        %664 = vmatprep.subr.mxu0 0.0
        %665 = vmatpush1.msra.mxu0 0.0
        %666 = vmatprep.mubr.f32.mxu0 0.0
        %667 = vmatmul.mubr.f32.gmra.mrb[0].mxu0 %v591
        %v668 = vpop.f32.mrb[0].mxu0
        %v669 = vadd.f32 %v588, %v668
        %v670 = vpop.f32.mrb[0].mxu0
        %671 = vmatprep.mubr.f32.mxu0 0.0
        %672 = vmatmul.mubr.f32.gmra.mrb[0].mxu0 %v594
        %v673 = vpop.f32.mrb[0].mxu0
        %v674 = vadd.f32 %v588, %v673
        %v675 = vpop.f32.mrb[0].mxu0
        %676 = vmatprep.mubr.f32.mxu0 0.0
        %677 = vmatmul.mubr.f32.gmra.mrb[0].mxu0 %v597
        %v678 = vpop.f32.mrb[0].mxu0
        %v679 = vadd.f32 %v588, %v678
        %v680 = vpop.f32.mrb[0].mxu0
        %681 = vmatprep.mubr.f32.mxu0 0.0
        %682 = vmatmul.mubr.f32.gmra.mrb[0].mxu0 %v600
        %v683 = vpop.f32.mrb[0].mxu0
        %v684 = vadd.f32 %v588, %v683
        %v685 = vpop.f32.mrb[0].mxu0
        %686 = vdwg.mxu0
        %v687 = vmul.f32 %v669, 0.5
        %v688 = vmul.f32 %v674, 0.5
        %v689 = vmul.f32 %v679, 0.5
        %v690 = vmul.f32 %v684, 0.5
        %v691 = vmul.f32 %v687, 1.442695
        %v692 = vpow.pop %v691
        %v693 = vmul.f32 %v688, 1.442695
        %v694 = vpow.pop %v693
        %v695 = vmul.f32 %v689, 1.442695
        %v696 = vpow.pop %v695
        %v697 = vmul.f32 %v690, 1.442695
        %v698 = vpow.pop %v697
        %703 = vrot.lane.b32.xlu0 %v239, 8
        %v704 = vpop.permute.xlu0 %703
        %705 = vrot.lane.b32.xlu0 %v240, 8
        %v706 = vpop.permute.xlu0 %705
        %707 = vrot.lane.b32.xlu0 %v241, 8
        %v708 = vpop.permute.xlu0 %707
        %709 = vrot.lane.b32.xlu0 %v242, 8
        %v710 = vpop.permute.xlu0 %709
        %v715 = vmul.f32 %v692, %v704
        %v716 = vmul.f32 %v694, %v706
        %v717 = vmul.f32 %v696, %v708
        %v718 = vmul.f32 %v698, %v710
        %723 = vrot.lane.b32.xlu0 %v715, 120
        %v724 = vpop.permute.xlu0 %723
        %725 = vrot.lane.b32.xlu0 %v716, 120
        %v726 = vpop.permute.xlu0 %725
        %727 = vrot.lane.b32.xlu0 %v717, 120
        %v728 = vpop.permute.xlu0 %727
        %729 = vrot.lane.b32.xlu0 %v718, 120
        %v730 = vpop.permute.xlu0 %729
        %v735 = vadd.f32 %v669, %v724
        %v736 = vadd.f32 %v674, %v726
        %v737 = vadd.f32 %v679, %v728
        %v738 = vadd.f32 %v684, %v730
        %v739 = vld [vmem:[#allocation2 + $0x20] sm:$0xff]
        %v740 = vld [vmem:[%s3 + $0x4] sm:$0x1]
        %v742 = vlaneseq
        %v743 = vshrl.u32 %v742, 7
        %v744 = vsub.s32 0, %v743
        %v745 = vrot.slane %v740, %v744
        %vm747 = vcmask 64512
        %v749 = vsel %vm747, %v735, 0
        %v752 = vsel %vm747, %v736, 0
        %v755 = vsel %vm747, %v737, 0
        %v758 = vsel %vm747, %v738, 0
        %760 = vmatprep.subr.mxu0 0.0
        %761 = vmatpush1.msra.mxu0 %v739
        %762 = vmatprep.subr.mxu0 0.0
        %763 = vmatpush1.msra.mxu0 0.0
        %764 = vmatprep.subr.mxu0 0.0
        %765 = vmatpush1.msra.mxu0 0.0
        %766 = vmatprep.subr.mxu0 0.0
        %767 = vmatpush1.msra.mxu0 0.0
        %768 = vmatprep.subr.mxu0 0.0
        %769 = vmatpush1.msra.mxu0 0.0
        %770 = vmatprep.subr.mxu0 0.0
        %771 = vmatpush1.msra.mxu0 0.0
        %772 = vmatprep.subr.mxu0 0.0
        %773 = vmatpush1.msra.mxu0 0.0
        %774 = vmatprep.subr.mxu0 0.0
        %775 = vmatpush1.msra.mxu0 0.0
        %776 = vmatprep.subr.mxu0 0.0
        %777 = vmatpush1.msra.mxu0 0.0
        %778 = vmatprep.subr.mxu0 0.0
        %779 = vmatpush1.msra.mxu0 0.0
        %780 = vmatprep.subr.mxu0 0.0
        %781 = vmatpush1.msra.mxu0 0.0
        %782 = vmatprep.subr.mxu0 0.0
        %783 = vmatpush1.msra.mxu0 0.0
        %784 = vmatprep.subr.mxu0 0.0
        %785 = vmatpush1.msra.mxu0 0.0
        %786 = vmatprep.subr.mxu0 0.0
        %787 = vmatpush1.msra.mxu0 0.0
        %788 = vmatprep.subr.mxu0 0.0
        %789 = vmatpush1.msra.mxu0 0.0
        %790 = vmatprep.subr.mxu0 0.0
        %791 = vmatpush1.msra.mxu0 0.0
        %792 = vmatprep.subr.mxu0 0.0
        %793 = vmatpush1.msra.mxu0 0.0
        %794 = vmatprep.subr.mxu0 0.0
        %795 = vmatpush1.msra.mxu0 0.0
        %796 = vmatprep.subr.mxu0 0.0
        %797 = vmatpush1.msra.mxu0 0.0
        %798 = vmatprep.subr.mxu0 0.0
        %799 = vmatpush1.msra.mxu0 0.0
        %800 = vmatprep.subr.mxu0 0.0
        %801 = vmatpush1.msra.mxu0 0.0
        %802 = vmatprep.subr.mxu0 0.0
        %803 = vmatpush1.msra.mxu0 0.0
        %804 = vmatprep.subr.mxu0 0.0
        %805 = vmatpush1.msra.mxu0 0.0
        %806 = vmatprep.subr.mxu0 0.0
        %807 = vmatpush1.msra.mxu0 0.0
        %808 = vmatprep.subr.mxu0 0.0
        %809 = vmatpush1.msra.mxu0 0.0
        %810 = vmatprep.subr.mxu0 0.0
        %811 = vmatpush1.msra.mxu0 0.0
        %812 = vmatprep.subr.mxu0 0.0
        %813 = vmatpush1.msra.mxu0 0.0
        %814 = vmatprep.subr.mxu0 0.0
        %815 = vmatpush1.msra.mxu0 0.0
        %816 = vmatprep.subr.mxu0 0.0
        %817 = vmatpush1.msra.mxu0 0.0
        %818 = vmatprep.subr.mxu0 0.0
        %819 = vmatpush1.msra.mxu0 0.0
        %820 = vmatprep.subr.mxu0 0.0
        %821 = vmatpush1.msra.mxu0 0.0
        %822 = vmatprep.subr.mxu0 0.0
        %823 = vmatpush1.msra.mxu0 0.0
        %824 = vmatprep.mubr.f32.mxu0 0.0
        %825 = vmatmul.mubr.f32.gmra.mrb[0].mxu0 %v749
        %v826 = vpop.f32.mrb[0].mxu0
        %v827 = vadd.f32 %v745, %v826
        %v828 = vpop.f32.mrb[0].mxu0
        %829 = vmatprep.mubr.f32.mxu0 0.0
        %830 = vmatmul.mubr.f32.gmra.mrb[0].mxu0 %v752
        %v831 = vpop.f32.mrb[0].mxu0
        %v832 = vadd.f32 %v745, %v831
        %v833 = vpop.f32.mrb[0].mxu0
        %834 = vmatprep.mubr.f32.mxu0 0.0
        %835 = vmatmul.mubr.f32.gmra.mrb[0].mxu0 %v755
        %v836 = vpop.f32.mrb[0].mxu0
        %v837 = vadd.f32 %v745, %v836
        %v838 = vpop.f32.mrb[0].mxu0
        %839 = vmatprep.mubr.f32.mxu0 0.0
        %840 = vmatmul.mubr.f32.gmra.mrb[0].mxu0 %v758
        %v841 = vpop.f32.mrb[0].mxu0
        %v842 = vadd.f32 %v745, %v841
        %v843 = vpop.f32.mrb[0].mxu0
        %844 = vdwg.mxu0
        %v845 = vtanh.pop %v827
        %v846 = vtanh.pop %v832
        %v847 = vtanh.pop %v837
        %v848 = vtanh.pop %v842
        %v849 = vld [vmem:[#allocation2 + $0x28] sm:$0xff]
        %v850 = vld [vmem:[#allocation2 + $0x68] sm:$0xff]
        %v851 = vld [vmem:[#allocation2 + $0xa8] sm:$0xff]
        %v852 = vld [vmem:[#allocation2 + $0xe8] sm:$0xff]
        %v853 = vld [vmem:[%s3 + $0x5] sm:$0x1]
        %v855 = vlaneseq
        %v856 = vshrl.u32 %v855, 7
        %v857 = vsub.s32 0, %v856
        %v858 = vrot.slane %v853, %v857
        %v861 = vsel %vm365, %v845, 0
        %v864 = vsel %vm365, %v846, 0
        %v867 = vsel %vm365, %v847, 0
        %v870 = vsel %vm365, %v848, 0
        %872 = vmatprep.subr.mxu0 0.0
        %873 = vmatpush1.msra.mxu0 %v849
        %874 = vmatprep.subr.mxu0 0.0
        %875 = vmatpush1.msra.mxu0 %v850
        %876 = vmatprep.subr.mxu0 0.0
        %877 = vmatpush1.msra.mxu0 %v851
        %878 = vmatprep.subr.mxu0 0.0
        %879 = vmatpush1.msra.mxu0 %v852
        %880 = vmatprep.subr.mxu0 0.0
        %881 = vmatpush1.msra.mxu0 0.0
        %882 = vmatprep.subr.mxu0 0.0
        %883 = vmatpush1.msra.mxu0 0.0
        %884 = vmatprep.subr.mxu0 0.0
        %885 = vmatpush1.msra.mxu0 0.0
        %886 = vmatprep.subr.mxu0 0.0
        %887 = vmatpush1.msra.mxu0 0.0
        %888 = vmatprep.subr.mxu0 0.0
        %889 = vmatpush1.msra.mxu0 0.0
        %890 = vmatprep.subr.mxu0 0.0
        %891 = vmatpush1.msra.mxu0 0.0
        %892 = vmatprep.subr.mxu0 0.0
        %893 = vmatpush1.msra.mxu0 0.0
        %894 = vmatprep.subr.mxu0 0.0
        %895 = vmatpush1.msra.mxu0 0.0
        %896 = vmatprep.subr.mxu0 0.0
        %897 = vmatpush1.msra.mxu0 0.0
        %898 = vmatprep.subr.mxu0 0.0
        %899 = vmatpush1.msra.mxu0 0.0
        %900 = vmatprep.subr.mxu0 0.0
        %901 = vmatpush1.msra.mxu0 0.0
        %902 = vmatprep.subr.mxu0 0.0
        %903 = vmatpush1.msra.mxu0 0.0
        %904 = vmatprep.subr.mxu0 0.0
        %905 = vmatpush1.msra.mxu0 0.0
        %906 = vmatprep.subr.mxu0 0.0
        %907 = vmatpush1.msra.mxu0 0.0
        %908 = vmatprep.subr.mxu0 0.0
        %909 = vmatpush1.msra.mxu0 0.0
        %910 = vmatprep.subr.mxu0 0.0
        %911 = vmatpush1.msra.mxu0 0.0
        %912 = vmatprep.subr.mxu0 0.0
        %913 = vmatpush1.msra.mxu0 0.0
        %914 = vmatprep.subr.mxu0 0.0
        %915 = vmatpush1.msra.mxu0 0.0
        %916 = vmatprep.subr.mxu0 0.0
        %917 = vmatpush1.msra.mxu0 0.0
        %918 = vmatprep.subr.mxu0 0.0
        %919 = vmatpush1.msra.mxu0 0.0
        %920 = vmatprep.subr.mxu0 0.0
        %921 = vmatpush1.msra.mxu0 0.0
        %922 = vmatprep.subr.mxu0 0.0
        %923 = vmatpush1.msra.mxu0 0.0
        %924 = vmatprep.subr.mxu0 0.0
        %925 = vmatpush1.msra.mxu0 0.0
        %926 = vmatprep.subr.mxu0 0.0
        %927 = vmatpush1.msra.mxu0 0.0
        %928 = vmatprep.subr.mxu0 0.0
        %929 = vmatpush1.msra.mxu0 0.0
        %930 = vmatprep.subr.mxu0 0.0
        %931 = vmatpush1.msra.mxu0 0.0
        %932 = vmatprep.subr.mxu0 0.0
        %933 = vmatpush1.msra.mxu0 0.0
        %934 = vmatprep.subr.mxu0 0.0
        %935 = vmatpush1.msra.mxu0 0.0
        %936 = vmatprep.mubr.f32.mxu0 0.0
        %937 = vmatmul.mubr.f32.gmra.mrb[0].mxu0 %v861
        %v938 = vpop.f32.mrb[0].mxu0
        %v939 = vadd.f32 %v858, %v938
        %v940 = vpop.f32.mrb[0].mxu0
        %941 = vmatprep.mubr.f32.mxu0 0.0
        %942 = vmatmul.mubr.f32.gmra.mrb[0].mxu0 %v864
        %v943 = vpop.f32.mrb[0].mxu0
        %v944 = vadd.f32 %v858, %v943
        %v945 = vpop.f32.mrb[0].mxu0
        %946 = vmatprep.mubr.f32.mxu0 0.0
        %947 = vmatmul.mubr.f32.gmra.mrb[0].mxu0 %v867
        %v948 = vpop.f32.mrb[0].mxu0
        %v949 = vadd.f32 %v858, %v948
        %v950 = vpop.f32.mrb[0].mxu0
        %951 = vmatprep.mubr.f32.mxu0 0.0
        %952 = vmatmul.mubr.f32.gmra.mrb[0].mxu0 %v870
        %v953 = vpop.f32.mrb[0].mxu0
        %v954 = vadd.f32 %v858, %v953
        %v955 = vpop.f32.mrb[0].mxu0
        %956 = vdwg.mxu0
        %v957 = vtanh.pop %v939
        %v958 = vtanh.pop %v944
        %v959 = vtanh.pop %v949
        %v960 = vtanh.pop %v954
        %v961 = vld [vmem:[#allocation2 + $0x30] sm:$0xff]
        %v962 = vld [vmem:[#allocation2 + $0x70] sm:$0xff]
        %v963 = vld [vmem:[#allocation2 + $0xb0] sm:$0xff]
        %v964 = vld [vmem:[#allocation2 + $0xf0] sm:$0xff]
        %v965 = vld [vmem:[%s3 + $0x6] sm:$0x1]
        %v967 = vlaneseq
        %v968 = vshrl.u32 %v967, 7
        %v969 = vsub.s32 0, %v968
        %v970 = vrot.slane %v965, %v969
        %v973 = vsel %vm365, %v957, 0
        %v976 = vsel %vm365, %v958, 0
        %v979 = vsel %vm365, %v959, 0
        %v982 = vsel %vm365, %v960, 0
        %984 = vmatprep.subr.mxu0 0.0
        %985 = vmatpush1.msra.mxu0 %v961
        %986 = vmatprep.subr.mxu0 0.0
        %987 = vmatpush1.msra.mxu0 %v962
        %988 = vmatprep.subr.mxu0 0.0
        %989 = vmatpush1.msra.mxu0 %v963
        %990 = vmatprep.subr.mxu0 0.0
        %991 = vmatpush1.msra.mxu0 %v964
        %992 = vmatprep.subr.mxu0 0.0
        %993 = vmatpush1.msra.mxu0 0.0
        %994 = vmatprep.subr.mxu0 0.0
        %995 = vmatpush1.msra.mxu0 0.0
        %996 = vmatprep.subr.mxu0 0.0
        %997 = vmatpush1.msra.mxu0 0.0
        %998 = vmatprep.subr.mxu0 0.0
        %999 = vmatpush1.msra.mxu0 0.0
        %1000 = vmatprep.subr.mxu0 0.0
        %1001 = vmatpush1.msra.mxu0 0.0
        %1002 = vmatprep.subr.mxu0 0.0
        %1003 = vmatpush1.msra.mxu0 0.0
        %1004 = vmatprep.subr.mxu0 0.0
        %1005 = vmatpush1.msra.mxu0 0.0
        %1006 = vmatprep.subr.mxu0 0.0
        %1007 = vmatpush1.msra.mxu0 0.0
        %1008 = vmatprep.subr.mxu0 0.0
        %1009 = vmatpush1.msra.mxu0 0.0
        %1010 = vmatprep.subr.mxu0 0.0
        %1011 = vmatpush1.msra.mxu0 0.0
        %1012 = vmatprep.subr.mxu0 0.0
        %1013 = vmatpush1.msra.mxu0 0.0
        %1014 = vmatprep.subr.mxu0 0.0
        %1015 = vmatpush1.msra.mxu0 0.0
        %1016 = vmatprep.subr.mxu0 0.0
        %1017 = vmatpush1.msra.mxu0 0.0
        %1018 = vmatprep.subr.mxu0 0.0
        %1019 = vmatpush1.msra.mxu0 0.0
        %1020 = vmatprep.subr.mxu0 0.0
        %1021 = vmatpush1.msra.mxu0 0.0
        %1022 = vmatprep.subr.mxu0 0.0
        %1023 = vmatpush1.msra.mxu0 0.0
        %1024 = vmatprep.subr.mxu0 0.0
        %1025 = vmatpush1.msra.mxu0 0.0
        %1026 = vmatprep.subr.mxu0 0.0
        %1027 = vmatpush1.msra.mxu0 0.0
        %1028 = vmatprep.subr.mxu0 0.0
        %1029 = vmatpush1.msra.mxu0 0.0
        %1030 = vmatprep.subr.mxu0 0.0
        %1031 = vmatpush1.msra.mxu0 0.0
        %1032 = vmatprep.subr.mxu0 0.0
        %1033 = vmatpush1.msra.mxu0 0.0
        %1034 = vmatprep.subr.mxu0 0.0
        %1035 = vmatpush1.msra.mxu0 0.0
        %1036 = vmatprep.subr.mxu0 0.0
        %1037 = vmatpush1.msra.mxu0 0.0
        %1038 = vmatprep.subr.mxu0 0.0
        %1039 = vmatpush1.msra.mxu0 0.0
        %1040 = vmatprep.subr.mxu0 0.0
        %1041 = vmatpush1.msra.mxu0 0.0
        %1042 = vmatprep.subr.mxu0 0.0
        %1043 = vmatpush1.msra.mxu0 0.0
        %1044 = vmatprep.subr.mxu0 0.0
        %1045 = vmatpush1.msra.mxu0 0.0
        %1046 = vmatprep.subr.mxu0 0.0
        %1047 = vmatpush1.msra.mxu0 0.0
        %1048 = vmatprep.mubr.f32.mxu0 0.0
        %1049 = vmatmul.mubr.f32.gmra.mrb[0].mxu0 %v973
        %v1050 = vpop.f32.mrb[0].mxu0
        %v1051 = vadd.f32 %v970, %v1050
        %v1052 = vpop.f32.mrb[0].mxu0
        %1053 = vmatprep.mubr.f32.mxu0 0.0
        %1054 = vmatmul.mubr.f32.gmra.mrb[0].mxu0 %v976
        %v1055 = vpop.f32.mrb[0].mxu0
        %v1056 = vadd.f32 %v970, %v1055
        %v1057 = vpop.f32.mrb[0].mxu0
        %1058 = vmatprep.mubr.f32.mxu0 0.0
        %1059 = vmatmul.mubr.f32.gmra.mrb[0].mxu0 %v979
        %v1060 = vpop.f32.mrb[0].mxu0
        %v1061 = vadd.f32 %v970, %v1060
        %v1062 = vpop.f32.mrb[0].mxu0
        %1063 = vmatprep.mubr.f32.mxu0 0.0
        %1064 = vmatmul.mubr.f32.gmra.mrb[0].mxu0 %v982
        %v1065 = vpop.f32.mrb[0].mxu0
        %v1066 = vadd.f32 %v970, %v1065
        %v1067 = vpop.f32.mrb[0].mxu0
        %1068 = vdwg.mxu0
        %v1069 = vtanh.pop %v1051
        %v1070 = vtanh.pop %v1056
        %v1071 = vtanh.pop %v1061
        %v1072 = vtanh.pop %v1066
        %v1073 = vld [vmem:[#allocation2 + $0x38] sm:$0xff]
        %v1074 = vld [vmem:[#allocation2 + $0x78] sm:$0xff]
        %v1075 = vld [vmem:[#allocation2 + $0xb8] sm:$0xff]
        %v1076 = vld [vmem:[#allocation2 + $0xf8] sm:$0xff]
        %v1077 = vld [vmem:[%s3 + $0x7] sm:$0x1]
        %v1079 = vlaneseq
        %v1080 = vshrl.u32 %v1079, 7
        %v1081 = vsub.s32 0, %v1080
        %v1082 = vrot.slane %v1077, %v1081
        %v1085 = vsel %vm365, %v1069, 0
        %v1088 = vsel %vm365, %v1070, 0
        %v1091 = vsel %vm365, %v1071, 0
        %v1094 = vsel %vm365, %v1072, 0
        %1096 = vmatprep.subr.mxu0 0.0
        %1097 = vmatpush1.msra.mxu0 %v1073
        %1098 = vmatprep.subr.mxu0 0.0
        %1099 = vmatpush1.msra.mxu0 %v1074
        %1100 = vmatprep.subr.mxu0 0.0
        %1101 = vmatpush1.msra.mxu0 %v1075
        %1102 = vmatprep.subr.mxu0 0.0
        %1103 = vmatpush1.msra.mxu0 %v1076
        %1104 = vmatprep.subr.mxu0 0.0
        %1105 = vmatpush1.msra.mxu0 0.0
        %1106 = vmatprep.subr.mxu0 0.0
        %1107 = vmatpush1.msra.mxu0 0.0
        %1108 = vmatprep.subr.mxu0 0.0
        %1109 = vmatpush1.msra.mxu0 0.0
        %1110 = vmatprep.subr.mxu0 0.0
        %1111 = vmatpush1.msra.mxu0 0.0
        %1112 = vmatprep.subr.mxu0 0.0
        %1113 = vmatpush1.msra.mxu0 0.0
        %1114 = vmatprep.subr.mxu0 0.0
        %1115 = vmatpush1.msra.mxu0 0.0
        %1116 = vmatprep.subr.mxu0 0.0
        %1117 = vmatpush1.msra.mxu0 0.0
        %1118 = vmatprep.subr.mxu0 0.0
        %1119 = vmatpush1.msra.mxu0 0.0
        %1120 = vmatprep.subr.mxu0 0.0
        %1121 = vmatpush1.msra.mxu0 0.0
        %1122 = vmatprep.subr.mxu0 0.0
        %1123 = vmatpush1.msra.mxu0 0.0
        %1124 = vmatprep.subr.mxu0 0.0
        %1125 = vmatpush1.msra.mxu0 0.0
        %1126 = vmatprep.subr.mxu0 0.0
        %1127 = vmatpush1.msra.mxu0 0.0
        %1128 = vmatprep.subr.mxu0 0.0
        %1129 = vmatpush1.msra.mxu0 0.0
        %1130 = vmatprep.subr.mxu0 0.0
        %1131 = vmatpush1.msra.mxu0 0.0
        %1132 = vmatprep.subr.mxu0 0.0
        %1133 = vmatpush1.msra.mxu0 0.0
        %1134 = vmatprep.subr.mxu0 0.0
        %1135 = vmatpush1.msra.mxu0 0.0
        %1136 = vmatprep.subr.mxu0 0.0
        %1137 = vmatpush1.msra.mxu0 0.0
        %1138 = vmatprep.subr.mxu0 0.0
        %1139 = vmatpush1.msra.mxu0 0.0
        %1140 = vmatprep.subr.mxu0 0.0
        %1141 = vmatpush1.msra.mxu0 0.0
        %1142 = vmatprep.subr.mxu0 0.0
        %1143 = vmatpush1.msra.mxu0 0.0
        %1144 = vmatprep.subr.mxu0 0.0
        %1145 = vmatpush1.msra.mxu0 0.0
        %1146 = vmatprep.subr.mxu0 0.0
        %1147 = vmatpush1.msra.mxu0 0.0
        %1148 = vmatprep.subr.mxu0 0.0
        %1149 = vmatpush1.msra.mxu0 0.0
        %1150 = vmatprep.subr.mxu0 0.0
        %1151 = vmatpush1.msra.mxu0 0.0
        %1152 = vmatprep.subr.mxu0 0.0
        %1153 = vmatpush1.msra.mxu0 0.0
        %1154 = vmatprep.subr.mxu0 0.0
        %1155 = vmatpush1.msra.mxu0 0.0
        %1156 = vmatprep.subr.mxu0 0.0
        %1157 = vmatpush1.msra.mxu0 0.0
        %1158 = vmatprep.subr.mxu0 0.0
        %1159 = vmatpush1.msra.mxu0 0.0
        %1160 = vmatprep.mubr.f32.mxu0 0.0
        %1161 = vmatmul.mubr.f32.gmra.mrb[0].mxu0 %v1085
        %v1162 = vpop.f32.mrb[0].mxu0
        %v1163 = vadd.f32 %v1082, %v1162
        %v1164 = vpop.f32.mrb[0].mxu0
        %1165 = vmatprep.mubr.f32.mxu0 0.0
        %1166 = vmatmul.mubr.f32.gmra.mrb[0].mxu0 %v1088
        %v1167 = vpop.f32.mrb[0].mxu0
        %v1168 = vadd.f32 %v1082, %v1167
        %v1169 = vpop.f32.mrb[0].mxu0
        %1170 = vmatprep.mubr.f32.mxu0 0.0
        %1171 = vmatmul.mubr.f32.gmra.mrb[0].mxu0 %v1091
        %v1172 = vpop.f32.mrb[0].mxu0
        %v1173 = vadd.f32 %v1082, %v1172
        %v1174 = vpop.f32.mrb[0].mxu0
        %1175 = vmatprep.mubr.f32.mxu0 0.0
        %1176 = vmatmul.mubr.f32.gmra.mrb[0].mxu0 %v1094
        %v1177 = vpop.f32.mrb[0].mxu0
        %v1178 = vadd.f32 %v1082, %v1177
        %v1179 = vpop.f32.mrb[0].mxu0
        %1180 = vdwg.mxu0
        %v1181 = vsub.f32 %v235, %v1163
        %v1182 = vsub.f32 %v236, %v1168
        %v1183 = vsub.f32 %v237, %v1173
        %v1184 = vsub.f32 %v238, %v1178
        %v1185 = vadd.f32 %v1163, 1.837877
        %v1186 = vadd.f32 %v1168, 1.837877
        %v1187 = vadd.f32 %v1173, 1.837877
        %v1188 = vadd.f32 %v1178, 1.837877
        %v1189 = vmul.f32 %v1185, 0.5
        %v1190 = vmul.f32 %v1186, 0.5
        %v1191 = vmul.f32 %v1187, 0.5
        %v1192 = vmul.f32 %v1188, 0.5
        %v1193 = vmul.f32 %v1181, 0.5
        %v1194 = vmul.f32 %v1182, 0.5
        %v1195 = vmul.f32 %v1183, 0.5
        %v1196 = vmul.f32 %v1184, 0.5
        %v1197 = vmul.f32 %v1193, %v1181
        %v1198 = vmul.f32 %v1194, %v1182
        %v1199 = vmul.f32 %v1195, %v1183
        %v1200 = vmul.f32 %v1196, %v1184
        %v1201 = vsub.f32 0.0, %v1163
        %v1202 = vsub.f32 0.0, %v1168
        %v1203 = vsub.f32 0.0, %v1173
        %v1204 = vsub.f32 0.0, %v1178
        %v1205 = vmul.f32 %v1201, 1.442695
        %v1206 = vpow.pop %v1205
        %v1207 = vmul.f32 %v1202, 1.442695
        %v1208 = vpow.pop %v1207
        %v1209 = vmul.f32 %v1203, 1.442695
        %v1210 = vpow.pop %v1209
        %v1211 = vmul.f32 %v1204, 1.442695
        %v1212 = vpow.pop %v1211
        %1217 = vrot.lane.b32.xlu0 %v1206, 112
        %v1218 = vpop.permute.xlu0 %1217
        %1219 = vrot.lane.b32.xlu0 %v1208, 112
        %v1220 = vpop.permute.xlu0 %1219
        %1221 = vrot.lane.b32.xlu0 %v1210, 112
        %v1222 = vpop.permute.xlu0 %1221
        %1223 = vrot.lane.b32.xlu0 %v1212, 112
        %v1224 = vpop.permute.xlu0 %1223
        %v1229 = vmul.f32 %v1197, %v1218
        %v1230 = vmul.f32 %v1198, %v1220
        %v1231 = vmul.f32 %v1199, %v1222
        %v1232 = vmul.f32 %v1200, %v1224
        %1237 = vrot.lane.b32.xlu0 %v1229, 16
        %v1238 = vpop.permute.xlu0 %1237
        %1239 = vrot.lane.b32.xlu0 %v1230, 16
        %v1240 = vpop.permute.xlu0 %1239
        %1241 = vrot.lane.b32.xlu0 %v1231, 16
        %v1242 = vpop.permute.xlu0 %1241
        %1243 = vrot.lane.b32.xlu0 %v1232, 16
        %v1244 = vpop.permute.xlu0 %1243
        %v1249 = vadd.f32 %v1189, %v1238
        %v1250 = vadd.f32 %v1190, %v1240
        %v1251 = vadd.f32 %v1191, %v1242
        %v1252 = vadd.f32 %v1192, %v1244
        %v1253 = vmul.f32 %v669, %v669
        %v1254 = vmul.f32 %v674, %v674
        %v1255 = vmul.f32 %v679, %v679
        %v1256 = vmul.f32 %v684, %v684
        %v1257 = vmul.f32 %v669, 1.442695
        %v1258 = vpow.pop %v1257
        %v1259 = vmul.f32 %v674, 1.442695
        %v1260 = vpow.pop %v1259
        %v1261 = vmul.f32 %v679, 1.442695
        %v1262 = vpow.pop %v1261
        %v1263 = vmul.f32 %v684, 1.442695
        %v1264 = vpow.pop %v1263
        %1269 = vrot.lane.b32.xlu0 %v1258, 120
        %v1270 = vpop.permute.xlu0 %1269
        %1271 = vrot.lane.b32.xlu0 %v1260, 120
        %v1272 = vpop.permute.xlu0 %1271
        %1273 = vrot.lane.b32.xlu0 %v1262, 120
        %v1274 = vpop.permute.xlu0 %1273
        %1275 = vrot.lane.b32.xlu0 %v1264, 120
        %v1276 = vpop.permute.xlu0 %1275
        %v1281 = vadd.f32 %v1253, %v1270
        %v1282 = vadd.f32 %v1254, %v1272
        %v1283 = vadd.f32 %v1255, %v1274
        %v1284 = vadd.f32 %v1256, %v1276
        %1289 = vrot.lane.b32.xlu0 %v669, 120
        %v1290 = vpop.permute.xlu0 %1289
        %1291 = vrot.lane.b32.xlu0 %v674, 120
        %v1292 = vpop.permute.xlu0 %1291
        %1293 = vrot.lane.b32.xlu0 %v679, 120
        %v1294 = vpop.permute.xlu0 %1293
        %1295 = vrot.lane.b32.xlu0 %v684, 120
        %v1296 = vpop.permute.xlu0 %1295
        %v1301 = vsub.f32 %v1281, %v1290
        %v1302 = vsub.f32 %v1282, %v1292
        %v1303 = vsub.f32 %v1283, %v1294
        %v1304 = vsub.f32 %v1284, %v1296
        %v1305 = vsub.f32 %v1301, 1.0
        %v1306 = vsub.f32 %v1302, 1.0
        %v1307 = vsub.f32 %v1303, 1.0
        %v1308 = vsub.f32 %v1304, 1.0
        %vm1309 = vcmask 261248
        %v1310 = vsel %vm1309, %v1249, 0.0
        %v1311 = vsel %vm1309, %v1250, 0.0
        %v1312 = vadd.f32 %v1310, %v1311
        %v1313 = vsel %vm1309, %v1251, 0.0
        %v1314 = vadd.f32 %v1312, %v1313
        %v1315 = vsel %vm1309, %v1252, 0.0
        %v1316 = vadd.f32 %v1314, %v1315
        %v1317 = vrot.slane %v1316, 4
        %v1318 = vadd.f32 %v1316, %v1317
        %v1319 = vrot.slane %v1318, 2
        %v1320 = vadd.f32 %v1318, %v1319
        %v1321 = vrot.slane %v1320, 1
        %v1322 = vadd.f32 %v1320, %v1321
        %1324 = vrot.lane.b32.xlu0 %v1322, 112
        %v1325 = vpop.permute.xlu0 %1324
        %vm1327 = vcmask 122880
        %v1328 = vsel %vm1327, %v1325, 0.0
        %1329 = vadd.xlane.f32.xlu0 %v1328
        %v1330 = vpop.xlane.xlu0 %1329
        %v1331 = vrot.slane %v1330, 4
        %v1332 = vadd.f32 %v1330, %v1331
        %v1333 = vrot.slane %v1332, 2
        %v1334 = vadd.f32 %v1332, %v1333
        %v1335 = vrot.slane %v1334, 1
        %v1336 = vadd.f32 %v1334, %v1335
        %s1337 = vtos %v1336
        %v1338 = vsel %vm747, %v1305, 0.0
        %v1339 = vsel %vm747, %v1306, 0.0
        %v1340 = vadd.f32 %v1338, %v1339
        %v1341 = vsel %vm747, %v1307, 0.0
        %v1342 = vadd.f32 %v1340, %v1341
        %v1343 = vsel %vm747, %v1308, 0.0
        %v1344 = vadd.f32 %v1342, %v1343
        %v1345 = vrot.slane %v1344, 4
        %v1346 = vadd.f32 %v1344, %v1345
        %v1347 = vrot.slane %v1346, 2
        %v1348 = vadd.f32 %v1346, %v1347
        %v1349 = vrot.slane %v1348, 1
        %v1350 = vadd.f32 %v1348, %v1349
        %vm1351 = vcmask 57344
        %v1352 = vsel %vm1351, %v1350, 0.0
        %1353 = vadd.xlane.f32.xlu0 %v1352
        %v1354 = vpop.xlane.xlu0 %1353
        %v1355 = vrot.slane %v1354, 4
        %v1356 = vadd.f32 %v1354, %v1355
        %v1357 = vrot.slane %v1356, 2
        %v1358 = vadd.f32 %v1356, %v1357
        %v1359 = vrot.slane %v1358, 1
        %v1360 = vadd.f32 %v1358, %v1359
        %s1361 = vtos %v1360
        %s1362 = smul.f32 %s1361, 0.5
        %v1363 = vlaneseq
        %v1364 = vand.u32 %v1363, 127
        %vm1365 = vcmp.eq.s32.totalorder %v1364, 0
        %vm1366 = vcmp.eq.s32.totalorder %v1364, 1
        %v1367 = vstv %s1362
        %v1368 = vsel %vm1366, %v1367, 0.0
        %v1369 = vstv %s1337
        %v1370 = vsel %vm1365, %v1369, %v1368
        %1371 = vst [vmem:[%s234] sm:$0xff] %v1370
        %p1372 = scmp.lt.s32.totalorder %s16, 1
        %s1373 = scalar_select %p1372, %s16, 1
        %s1374 = smul.addr %s1373, 8
        %s1375 = scalar_lea.vmem %s4, %s1374
        // Predicated region
        $region41: #{gaussian_network_forward.1} parent=35 // pred_check
          %p1376 = pneg %p128
        $region42: #{gaussian_network_forward.1} parent=35 // pred_check_branch
          %1378 = sbr.rel (%p1376) target = $region44
        $region43: #{gaussian_network_forward.1} parent=35 // pred_region
          _
        $region44: #{gaussian_network_forward.1} parent=35 // pred_fallthru
          _
      $region36: #{gaussian_network_forward.1} parent=5 // pred_fallthru
        _
      %p1379 = scmp.le.s32.totalorder 2, %s11
      // Predicated region
      $region45: #{gaussian_network_forward.1} parent=5 // pred_check
        %p1380 = pneg %p1379
      $region46: #{gaussian_network_forward.1} parent=5 // pred_check_branch
        %1382 = sbr.rel (%p1380) target = $region48
      $region47: #{gaussian_network_forward.1} parent=5 // pred_region
        %s1383 = ssub.s32 %s11, 2
        // Predicated region
        $region49: #{gaussian_network_forward.1} parent=47 // pred_check
          %p1384 = pneg %p134
        $region50: #{gaussian_network_forward.1} parent=47 // pred_check_branch
          %1386 = sbr.rel (%p1384) target = $region52
        $region51: #{gaussian_network_forward.1} parent=47 // pred_region
          %p1387 = scmp.lt.s32.totalorder %s17, 1
          %s1388 = scalar_select %p1387, %s17, 1
          %s1389 = smul.addr %s1388, 8
          %s1390 = scalar_lea.vmem %s4, %s1389
        $region52: #{gaussian_network_forward.1} parent=47 // pred_fallthru
          _
      $region48: #{gaussian_network_forward.1} parent=5 // pred_fallthru
        _
    $region6: #{gaussian_network_forward.1} parent=1 // loop_footer
      %s15 = sadd.s32 1, %s11
    $region7: #{gaussian_network_forward.1} parent=1 // loop_footer_branch
      %10 = sbr.rel target = $region3
    $region8: #{gaussian_network_forward.1} parent=1 // loop_exit
      _
    %1391 = vsyncpa [#allocation3], 1
    %s1392 = scalar_lea.sflag [#allocation3], 1
    %1393 = vsyncpa %s1392, 1

</llo_original>
